<compile_context>
chip_gen: v6e
topology: v6e:2x2x1
jax: 0.10.0
libtpu: 0.0.40
codegen_flags: <defaults>
</compile_context>

<pallas_src>
import functools

import jax
import jax.numpy as jnp
import numpy as np
from jax.experimental import pallas as pl
from jax.experimental.pallas import tpu as pltpu

KMIN = 3
KMAX = 5


# ---------------------------------------------------------------------------
# Pallas kernel: one grid step = one conv branch (K = 3 + branch_idx)
# ---------------------------------------------------------------------------
def cnn_kernel(x_ref,      # (B, Lp, C)        bf16   (shared across branches)
               w_ref,      # (1, KMAX*C, O)    bf16   (tap-padded, branch slice)
               b_ref,      # (1, 1, O)         f32
               wl_ref,     # (1, NC, O)        f32    (linear weight branch slice)
               bl_ref,     # (1, NC)           f32
               out_ref,    # (B, NC)           f32
               acc_ref,    # (B, NC)           f32    scratch (logits accumulator)
               *, lout_base, kmax):
    i = pl.program_id(0)
    B, Lp, C = x_ref.shape
    lout_p = Lp - kmax + 1                      # padded time extent (multiple of 16)
    O = w_ref.shape[-1]

    @pl.when(i == 0)
    def _init():
        acc_ref[...] = jnp.zeros_like(acc_ref)

    # ----- im2col: (B, lout_p, KMAX*C) built from lane-dense C slices -----
    x = x_ref[...]                                               # bf16
    patches = jnp.concatenate(
        [x[:, j:j + lout_p, :] for j in range(kmax)], axis=-1)   # (B, lout_p, kmax*C)
    patches = patches.reshape(B * lout_p, kmax * C)              # tile-aligned collapse

    # ----- one MXU matmul per branch: lane dim = O = 700 -----
    conv = jnp.dot(patches, w_ref[0],
                   preferred_element_type=jnp.float32)           # (B*lout_p, O) f32
    conv = jnp.maximum(conv + b_ref[0], 0.0)                     # bias (1,O) + ReLU

    # ----- mask invalid (padded) time positions, then max over time -----
    conv = conv.reshape(B, lout_p, O)
    t = jax.lax.broadcasted_iota(jnp.int32, (B, lout_p, O), 1)
    valid = lout_base - i                                        # = L - (3+i) + 1
    conv = jnp.where(t < valid, conv, 0.0)                       # safe: ReLU output >= 0
    m = jnp.max(conv, axis=1)                                    # (B, O) f32

    # ----- partial linear: (B,O) x (NC,O) contracted over O -----
    part = jax.lax.dot_general(m, wl_ref[0],
                               (((1,), (1,)), ((), ())),
                               preferred_element_type=jnp.float32)   # (B, NC)
    acc_ref[...] += part

    @pl.when(i == pl.num_programs(0) - 1)
    def _finalize():
        logits = acc_ref[...] + bl_ref[...]
        mx = jnp.max(logits, axis=1, keepdims=True)
        sh = logits - mx
        lse = jnp.log(jnp.sum(jnp.exp(sh), axis=1, keepdims=True))
        out_ref[...] = sh - lse                                  # log_softmax(dim=1)


# ---------------------------------------------------------------------------
# Parameter construction (deterministic, PyTorch-like shapes)
# ---------------------------------------------------------------------------
def init_params(key, vocab_size, dim_emb, num_classes):
    ks = jax.random.split(key, 9)
    O = 700
    return {
        "embedding": jax.random.normal(ks[0], (vocab_size, dim_emb), jnp.float32),
        "conv1_w": jax.random.uniform(ks[1], (O, dim_emb, 3), jnp.float32,
                                      -1.0, 1.0) / np.sqrt(dim_emb * 3),
        "conv1_b": jax.random.uniform(ks[2], (O,), jnp.float32,
                                      -1.0, 1.0) / np.sqrt(dim_emb * 3),
        "conv2_w": jax.random.uniform(ks[3], (O, dim_emb, 4), jnp.float32,
                                      -1.0, 1.0) / np.sqrt(dim_emb * 4),
        "conv2_b": jax.random.uniform(ks[4], (O,), jnp.float32,
                                      -1.0, 1.0) / np.sqrt(dim_emb * 4),
        "conv3_w": jax.random.uniform(ks[5], (O, dim_emb, 5), jnp.float32,
                                      -1.0, 1.0) / np.sqrt(dim_emb * 5),
        "conv3_b": jax.random.uniform(ks[6], (O,), jnp.float32,
                                      -1.0, 1.0) / np.sqrt(dim_emb * 5),
        "linear_w": jax.random.uniform(ks[7], (num_classes, 3 * O), jnp.float32,
                                       -1.0, 1.0) / np.sqrt(3 * O),
        "linear_b": jax.random.uniform(ks[8], (num_classes,), jnp.float32,
                                       -1.0, 1.0) / np.sqrt(3 * O),
    }


# ---------------------------------------------------------------------------
# One-time parameter re-layout (hoisted OUT of the per-call hot path)
# ---------------------------------------------------------------------------
def prepare_params(params):
    O, C, _ = params["conv1_w"].shape
    nc = params["linear_w"].shape[0]

    def pack_conv(w):                            # (O, C, K) -> (KMAX*C, O), zero-padded taps
        K = w.shape[-1]
        wb = jnp.transpose(w, (2, 1, 0)).reshape(K * C, O)
        return jnp.pad(wb, ((0, (KMAX - K) * C), (0, 0)))

    conv_w = jnp.stack([pack_conv(params["conv1_w"]),
                        pack_conv(params["conv2_w"]),
                        pack_conv(params["conv3_w"])]).astype(jnp.bfloat16)   # (3, KMAX*C, O)
    conv_b = jnp.stack([params["conv1_b"], params["conv2_b"],
                        params["conv3_b"]])[:, None, :]                        # (3, 1, O) f32
    lw = params["linear_w"]                                                    # (NC, 3*O)
    lin_w = jnp.stack([lw[:, br * O:(br + 1) * O] for br in range(3)])         # (3, NC, O) f32
    lin_b = params["linear_b"][None, :]                                        # (1, NC) f32
    return {
        "embedding": params["embedding"],
        "conv_w": conv_w,
        "conv_b": conv_b,
        "lin_w": lin_w,
        "lin_b": lin_b,
    }


# ---------------------------------------------------------------------------
# Forward (embedding lookup + quirk reshape in plain JAX, hot path in Pallas)
# ---------------------------------------------------------------------------
@functools.partial(jax.jit, static_argnames=("num_classes",))
def cnn_forward(tokens, prepped, num_classes=2):
    emb = prepped["embedding"][tokens]                 # (B, L, D)
    # TODO(synk): nn.Dropout(p=0.55) implemented as identity (inference mode).
    B, L, D = emb.shape

    # Reproduce PyTorch raw `reshape((B, D, L))` (NOT a transpose), then transpose
    # to (B, L, C) so conv input slices are lane-dense over C.
    xq = emb.reshape(B, D, L)
    x = jnp.transpose(xq, (0, 2, 1))                   # (B, L, C)

    lout_base = L - KMIN + 1                           # true max conv output length
    lout_p = ((lout_base + 15) // 16) * 16             # pad to bf16 sublane tile
    lp = lout_p + KMAX - 1                             # padded time axis for x
    x = jnp.pad(x, ((0, 0), (0, lp - L), (0, 0))).astype(jnp.bfloat16)

    conv_w = prepped["conv_w"]                         # (3, KMAX*C, O) bf16
    conv_b = prepped["conv_b"]                         # (3, 1, O)      f32
    lin_w = prepped["lin_w"]                           # (3, NC, O)     f32
    lin_b = prepped["lin_b"]                           # (1, NC)        f32
    O = conv_w.shape[-1]
    C = D
    NC = num_classes

    grid_spec = pltpu.PrefetchScalarGridSpec(
        num_scalar_prefetch=0,
        grid=(3,),
        in_specs=[
            pl.BlockSpec((B, lp, C), lambda i: (0, 0, 0)),          # x (resident)
            pl.BlockSpec((1, KMAX * C, O), lambda i: (i, 0, 0)),    # conv weights/branch
            pl.BlockSpec((1, 1, O), lambda i: (i, 0, 0)),           # conv bias/branch
            pl.BlockSpec((1, NC, O), lambda i: (i, 0, 0)),          # linear slice/branch
            pl.BlockSpec((1, NC), lambda i: (0, 0)),                # linear bias
        ],
        out_specs=pl.BlockSpec((B, NC), lambda i: (0, 0)),
        scratch_shapes=[pltpu.VMEM((B, NC), jnp.float32)],
    )

    out = pl.pallas_call(
        functools.partial(cnn_kernel, lout_base=lout_base, kmax=KMAX),
        out_shape=jax.ShapeDtypeStruct((B, NC), jnp.float32),
        grid_spec=grid_spec,
        compiler_params=pltpu.CompilerParams(
            # "arbitrary": the logits accumulator carries across branches.
            dimension_semantics=("arbitrary",),
            vmem_limit_bytes=32 * 1024 * 1024,
        ),
    )(x, conv_w, conv_b, lin_w, lin_b)
    return out


if __name__ == "__main__":
    VOCAB_SIZE = 50
    DIM_EMB = 128          # constructor parameter; lane-dense C for this synthetic run
    NUM_CLASSES = 2
    B, L = 2, 16           # L must be >= 5 (largest conv kernel)

    key = jax.random.PRNGKey(0)
    k_param, k_tok = jax.random.split(key)
    params = init_params(k_param, VOCAB_SIZE, DIM_EMB, NUM_CLASSES)
    prepped = prepare_params(params)                   # one-time layout prep (not hot path)
    prepped = jax.tree_util.tree_map(jax.block_until_ready, prepped)

    tokens = jax.random.randint(k_tok, (B, L), 0, VOCAB_SIZE, dtype=jnp.int32)

    out = cnn_forward(tokens, prepped, num_classes=NUM_CLASSES)
    out = jax.block_until_ready(out)

    # Sanity: log_softmax rows exponentiate and sum to 1.
    probs_sum = np.asarray(jnp.sum(jnp.exp(out), axis=1))
    assert out.shape == (B, NUM_CLASSES)
    assert np.allclose(probs_sum, 1.0, atol=1e-3), probs_sum

    print("KERNEL_OK")
</pallas_src>

<mosaic_0001>
module attributes {stable_mosaic.version = 11 : i64} {
  func.func @cnn_kernel(%arg0: i32, %arg1: memref<2x20x128xbf16, #tpu.memory_space<vmem>>, %arg2: memref<1x640x700xbf16, #tpu.memory_space<vmem>>, %arg3: memref<1x1x700xf32, #tpu.memory_space<vmem>>, %arg4: memref<1x2x700xf32, #tpu.memory_space<vmem>>, %arg5: memref<1x2xf32, #tpu.memory_space<vmem>>, %arg6: memref<2x2xf32, #tpu.memory_space<vmem>>, %arg7: memref<2x2xf32, #tpu.memory_space<vmem>>) attributes {dimension_semantics = [#tpu.dimension_semantics<arbitrary>], iteration_bounds = array<i64: 3>, scalar_prefetch = 0 : i64, scratch_operands = 1 : i64, tpu.core_type = #tpu.core_type<tc>, window_params = [{pipeline_mode = #tpu.pipeline_mode<synchronous>, transform_indices = @transform_0, window_bounds = array<i64: 2, 20, 128>}, {transform_indices = @transform_1, window_bounds = array<i64: 1, 640, 700>}, {transform_indices = @transform_2, window_bounds = array<i64: 1, 1, 700>}, {transform_indices = @transform_3, window_bounds = array<i64: 1, 2, 700>}, {pipeline_mode = #tpu.pipeline_mode<synchronous>, transform_indices = @transform_4, window_bounds = array<i64: 1, 2>}, {pipeline_mode = #tpu.pipeline_mode<synchronous>, transform_indices = @transform_5, window_bounds = array<i64: 2, 2>}]} {
    %c0_i32 = arith.constant 0 : i32
    %0 = arith.cmpi eq, %arg0, %c0_i32 : i32
    %1 = arith.extui %0 : i1 to i32
    %c0_i32_0 = arith.constant 0 : i32
    %2 = arith.cmpi ne, %1, %c0_i32_0 : i32
    scf.if %2 {
      %cst_21 = arith.constant 0.000000e+00 : f32
      %37 = vector.broadcast %cst_21 : f32 to vector<2x2xf32>
      %c0_22 = arith.constant 0 : index
      %c0_23 = arith.constant 0 : index
      %38 = vector.load %arg7[%c0_22, %c0_23] : memref<2x2xf32, #tpu.memory_space<vmem>>, vector<2x2xf32>
      tpu.vector_store %arg7[%c0_22, %c0_23], %37 {strides = array<i32>} : memref<2x2xf32, #tpu.memory_space<vmem>>, vector<2x2xf32>,
    } else {
    }
    %c0 = arith.constant 0 : index
    %c0_1 = arith.constant 0 : index
    %c0_2 = arith.constant 0 : index
    %3 = vector.load %arg1[%c0, %c0_1, %c0_2] : memref<2x20x128xbf16, #tpu.memory_space<vmem>>, vector<2x20x128xbf16>
    %4 = vector.extract_strided_slice %3 {offsets = [0, 0, 0], sizes = [2, 16, 128], strides = [1, 1, 1]} : vector<2x20x128xbf16> to vector<2x16x128xbf16>
    %5 = vector.extract_strided_slice %3 {offsets = [0, 1, 0], sizes = [2, 16, 128], strides = [1, 1, 1]} : vector<2x20x128xbf16> to vector<2x16x128xbf16>
    %6 = vector.extract_strided_slice %3 {offsets = [0, 2, 0], sizes = [2, 16, 128], strides = [1, 1, 1]} : vector<2x20x128xbf16> to vector<2x16x128xbf16>
    %7 = vector.extract_strided_slice %3 {offsets = [0, 3, 0], sizes = [2, 16, 128], strides = [1, 1, 1]} : vector<2x20x128xbf16> to vector<2x16x128xbf16>
    %8 = vector.extract_strided_slice %3 {offsets = [0, 4, 0], sizes = [2, 16, 128], strides = [1, 1, 1]} : vector<2x20x128xbf16> to vector<2x16x128xbf16>
    %9 = tpu.concatenate %4, %5, %6, %7, %8 in 2 : vector<2x16x128xbf16>, vector<2x16x128xbf16>, vector<2x16x128xbf16>, vector<2x16x128xbf16>, vector<2x16x128xbf16> -> vector<2x16x640xbf16>
    %10 = vector.shape_cast %9 : vector<2x16x640xbf16> to vector<32x640xbf16>
    %c0_3 = arith.constant 0 : index
    %c0_4 = arith.constant 0 : index
    %c0_5 = arith.constant 0 : index
    %11 = vector.load %arg2[%c0_3, %c0_4, %c0_5] : memref<1x640x700xbf16, #tpu.memory_space<vmem>>, vector<1x640x700xbf16>
    %12 = vector.shape_cast %11 : vector<1x640x700xbf16> to vector<640x700xbf16>
    %cst = arith.constant dense<0.000000e+00> : vector<32x700xf32>
    %13 = tpu.matmul %10, %12, %cst {dimension_numbers = #tpu.dot_dimension_numbers<[1], [0], [0], [1], [0, 0, 1, 1], [], []>} : vector<32x640xbf16>, vector<640x700xbf16>, vector<32x700xf32> -> vector<32x700xf32>
    %c0_6 = arith.constant 0 : index
    %c0_7 = arith.constant 0 : index
    %c0_8 = arith.constant 0 : index
    %14 = vector.load %arg3[%c0_6, %c0_7, %c0_8] : memref<1x1x700xf32, #tpu.memory_space<vmem>>, vector<1x1x700xf32>
    %15 = vector.shape_cast %14 : vector<1x1x700xf32> to vector<1x700xf32>
    %16 = vector.broadcast %15 : vector<1x700xf32> to vector<32x700xf32>
    %17 = arith.addf %13, %16 : vector<32x700xf32>
    %cst_9 = arith.constant 0.000000e+00 : f32
    %18 = vector.broadcast %cst_9 : f32 to vector<32x700xf32>
    %19 = arith.maximumf %17, %18 : vector<32x700xf32>
    %20 = vector.shape_cast %19 : vector<32x700xf32> to vector<2x16x700xf32>
    %21 = tpu.iota {dimensions = array<i32: 1>} : vector<2x16x700xi32>
    %c14_i32 = arith.constant 14 : i32
    %22 = arith.subi %c14_i32, %arg0 : i32
    %23 = vector.broadcast %22 : i32 to vector<2x16x700xi32>
    %24 = arith.cmpi slt, %21, %23 : vector<2x16x700xi32>
    %cst_10 = arith.constant 0.000000e+00 : f32
    %25 = vector.broadcast %cst_10 : f32 to vector<2x16x700xf32>
    %26 = arith.select %24, %20, %25 : vector<2x16x700xi1>, vector<2x16x700xf32>
    %cst_11 = arith.constant dense<0xFF800000> : vector<2x700xf32>
    %27 = vector.multi_reduction <maximumf>, %26, %cst_11 [1] : vector<2x16x700xf32> to vector<2x700xf32>
    %c0_12 = arith.constant 0 : index
    %c0_13 = arith.constant 0 : index
    %c0_14 = arith.constant 0 : index
    %28 = vector.load %arg4[%c0_12, %c0_13, %c0_14] : memref<1x2x700xf32, #tpu.memory_space<vmem>>, vector<1x2x700xf32>
    %29 = vector.shape_cast %28 : vector<1x2x700xf32> to vector<2x700xf32>
    %cst_15 = arith.constant dense<0.000000e+00> : vector<2x2xf32>
    %30 = tpu.matmul %27, %29, %cst_15 {dimension_numbers = #tpu.dot_dimension_numbers<[1], [1], [0], [0], [0, 0, 1, 0], [], []>} : vector<2x700xf32>, vector<2x700xf32>, vector<2x2xf32> -> vector<2x2xf32>
    %c0_16 = arith.constant 0 : index
    %c0_17 = arith.constant 0 : index
    %31 = vector.load %arg7[%c0_16, %c0_17] : memref<2x2xf32, #tpu.memory_space<vmem>>, vector<2x2xf32>
    %32 = arith.addf %31, %30 : vector<2x2xf32>
    %c0_18 = arith.constant 0 : index
    %c0_19 = arith.constant 0 : index
    %33 = vector.load %arg7[%c0_18, %c0_19] : memref<2x2xf32, #tpu.memory_space<vmem>>, vector<2x2xf32>
    tpu.vector_store %arg7[%c0_18, %c0_19], %32 {strides = array<i32>} : memref<2x2xf32, #tpu.memory_space<vmem>>, vector<2x2xf32>,
    %c2_i32 = arith.constant 2 : i32
    %34 = arith.cmpi eq, %arg0, %c2_i32 : i32
    %35 = arith.extui %34 : i1 to i32
    %c0_i32_20 = arith.constant 0 : i32
    %36 = arith.cmpi ne, %35, %c0_i32_20 : i32
    scf.if %36 {
      %c0_21 = arith.constant 0 : index
      %c0_22 = arith.constant 0 : index
      %37 = vector.load %arg7[%c0_21, %c0_22] : memref<2x2xf32, #tpu.memory_space<vmem>>, vector<2x2xf32>
      %c0_23 = arith.constant 0 : index
      %c0_24 = arith.constant 0 : index
      %38 = vector.load %arg5[%c0_23, %c0_24] : memref<1x2xf32, #tpu.memory_space<vmem>>, vector<1x2xf32>
      %39 = vector.broadcast %38 : vector<1x2xf32> to vector<2x2xf32>
      %40 = arith.addf %37, %39 : vector<2x2xf32>
      %cst_25 = arith.constant dense<0xFF800000> : vector<2xf32>
      %41 = vector.multi_reduction <maximumf>, %40, %cst_25 [1] : vector<2x2xf32> to vector<2xf32>
      %42 = vector.shape_cast %41 : vector<2xf32> to vector<2x1xf32>
      %43 = vector.broadcast %42 : vector<2x1xf32> to vector<2x2xf32>
      %44 = arith.subf %40, %43 : vector<2x2xf32>
      %45 = math.exp %44 : vector<2x2xf32>
      %cst_26 = arith.constant dense<0.000000e+00> : vector<2xf32>
      %46 = vector.multi_reduction <add>, %45, %cst_26 [1] : vector<2x2xf32> to vector<2xf32>
      %47 = vector.shape_cast %46 : vector<2xf32> to vector<2x1xf32>
      %48 = math.log %47 : vector<2x1xf32>
      %49 = vector.broadcast %48 : vector<2x1xf32> to vector<2x2xf32>
      %50 = arith.subf %44, %49 : vector<2x2xf32>
      %c0_27 = arith.constant 0 : index
      %c0_28 = arith.constant 0 : index
      %51 = vector.load %arg6[%c0_27, %c0_28] : memref<2x2xf32, #tpu.memory_space<vmem>>, vector<2x2xf32>
      tpu.vector_store %arg6[%c0_27, %c0_28], %50 {strides = array<i32>} : memref<2x2xf32, #tpu.memory_space<vmem>>, vector<2x2xf32>,
    } else {
    }
    return
  }
  func.func @transform_0(%arg0: i32) -> (i32, i32, i32) {
    %c0_i32 = arith.constant 0 : i32
    %c0_i32_0 = arith.constant 0 : i32
    %c0_i32_1 = arith.constant 0 : i32
    %c0_i32_2 = arith.constant 0 : i32
    return %c0_i32, %c0_i32_0, %c0_i32_1 : i32, i32, i32
  }
  func.func @transform_1(%arg0: i32) -> (i32, i32, i32) {
    %c0_i32 = arith.constant 0 : i32
    %c0_i32_0 = arith.constant 0 : i32
    %c0_i32_1 = arith.constant 0 : i32
    return %arg0, %c0_i32, %c0_i32_0 : i32, i32, i32
  }
  func.func @transform_2(%arg0: i32) -> (i32, i32, i32) {
    %c0_i32 = arith.constant 0 : i32
    %c0_i32_0 = arith.constant 0 : i32
    %c0_i32_1 = arith.constant 0 : i32
    return %arg0, %c0_i32, %c0_i32_0 : i32, i32, i32
  }
  func.func @transform_3(%arg0: i32) -> (i32, i32, i32) {
    %c0_i32 = arith.constant 0 : i32
    %c0_i32_0 = arith.constant 0 : i32
    %c0_i32_1 = arith.constant 0 : i32
    return %arg0, %c0_i32, %c0_i32_0 : i32, i32, i32
  }
  func.func @transform_4(%arg0: i32) -> (i32, i32) {
    %c0_i32 = arith.constant 0 : i32
    %c0_i32_0 = arith.constant 0 : i32
    %c0_i32_1 = arith.constant 0 : i32
    return %c0_i32, %c0_i32_0 : i32, i32
  }
  func.func @transform_5(%arg0: i32) -> (i32, i32) {
    %c0_i32 = arith.constant 0 : i32
    %c0_i32_0 = arith.constant 0 : i32
    %c0_i32_1 = arith.constant 0 : i32
    return %c0_i32, %c0_i32_0 : i32, i32
  }
}

</mosaic_0001>

<llo_original>
// kernel: cnn_forward.1
$region0: #{cnn_forward.1}
  #allocation0 [shape = 'u32[]', space=smem, size = 0x4, offset = 0x4, fixed_abs, tag = 'smem constant byte address 0x4 - core index']
  #allocation1 [shape = 'u32[144,128]{1,0:T(1,128)}', space=vmem, size = 0x12000, scoped, tag = 'internal scratch']
  #allocation2 [shape = 'f32[2,2]{1,0:T(2,128)}', space=vmem, size = 0x400, scoped, tag = 'scratch operand']
  %s0 = inlined_call_operand.vmem [shape: bf16[2,20,128], index: 0, kind: input, shape index: {}]
  %s1 = inlined_call_operand.vmem [shape: bf16[3,640,700], index: 1, kind: input, shape index: {}]
  %s2 = inlined_call_operand.vmem [shape: f32[3,1,700], index: 2, kind: input, shape index: {}]
  %s3 = inlined_call_operand.vmem [shape: f32[3,2,700], index: 3, kind: input, shape index: {}]
  %s4 = inlined_call_operand.vmem [shape: f32[1,2], index: 4, kind: input, shape index: {}]
  %s5 = inlined_call_operand.hbm [shape: f32[2,2], index: 5, kind: output, shape index: {}]
  %s6 = sld [smem:[#allocation0]]
  $region61: #{cnn_forward.1} parent=0
    _
  %s8 = ssub.s32 1, %s6
  %s9 = scalar_select 0, %s8, %s6
  $region1: #{cnn_forward.1} parent=0
    #allocation3 [shape = 'u8[1024]{0}', space=vmem, size = 0x400, scoped, tag = 'output window, operand 0, single buffered']
    #allocation4 [shape = 's32[2]{0}', space=sflag, size = 0x8, scoped, tag = 'scoped memory for cnn_forward.1']
    %10 = vsyncpa [#allocation4], 0
    loop: start=0, step=1, limit=5
    $region2: #{cnn_forward.1} parent=1 // loop_pre_header
      _
    $region3: #{cnn_forward.1} parent=1 // loop_header
      %s12 = sphi 0, %s16
      %p13 = scmp.ge.s32.totalorder %s12, 5
      %s20 = sphi 0, %s20
      %s22 = sphi 0, %s20
      %s23 = sphi 0, %s22
      %s37 = sphi 0, %s23
      %s43 = sphi 0, %s45
      %s46 = sphi 0, %s43
      %s47 = sphi 0, %s46
      %s63 = sphi 0, %s47
      %s69 = sphi 0, %s71
      %s72 = sphi 0, %s69
      %s73 = sphi 0, %s72
      %s89 = sphi 0, %s73
      %s95 = sphi 0, %s97
      %s98 = sphi 0, %s95
      %s99 = sphi 0, %s98
      %s115 = sphi 0, %s99
      %s119 = sphi 0, %s119
      %s121 = sphi 0, %s119
      %s122 = sphi 0, %s121
      %s136 = sphi 0, %s122
      %s140 = sphi 0, %s140
      %s142 = sphi 0, %s140
      %s143 = sphi 0, %s142
      %s157 = sphi 0, %s143
    $region4: #{cnn_forward.1} parent=1 // loop_header_branch
      %15 = sbr.rel (%p13) target = $region8
    $region5: #{cnn_forward.1} parent=1 // loop_body
      %s17 = ssub.s32 %s12, 1
      %s18 = ssub.s32 %s12, 2
      %s19 = sadd.s32 %s12, 1
      %s21 = sadd.s32 %s20, 1
      %p24 = scmp.eq.s32.totalorder %s12, 2
      %p25 = scmp.ne.s32.totalorder %s20, %s22
      %p26 = scmp.eq.s32.totalorder %s12, 0
      %p27 = por %p25, %p26
      %p28 = scmp.ne.s32.totalorder %s20, %s22
      %p29 = scmp.eq.s32.totalorder %s17, 2
      %p30 = por %p28, %p29
      %p31 = scmp.ne.s32.totalorder %s22, %s23
      %p32 = scmp.eq.s32.totalorder %s17, 0
      %p33 = por %p31, %p32
      %p34 = scmp.ne.s32.totalorder %s22, %s23
      %p35 = scmp.eq.s32.totalorder %s18, 2
      %p36 = por %p34, %p35
      %p38 = scmp.ne.s32.totalorder %s23, %s37
      %p39 = scmp.eq.s32.totalorder %s18, 0
      %p40 = por %p38, %p39
      %s41 = ssub.s32 %s12, %s19
      %p42 = scmp.eq.s32.totalorder %s41, 0
      %s44 = sadd.s32 %s43, 1
      %s45 = scalar_select %p42, %s43, %s44
      %p48 = pneg %p42
      %p49 = scmp.eq.s32.totalorder %s12, 2
      %p50 = por %p48, %p49
      %p51 = scmp.ne.s32.totalorder %s43, %s46
      %p52 = scmp.eq.s32.totalorder %s12, 0
      %p53 = por %p51, %p52
      %p54 = scmp.ne.s32.totalorder %s43, %s46
      %p55 = scmp.eq.s32.totalorder %s17, 2
      %p56 = por %p54, %p55
      %p57 = scmp.ne.s32.totalorder %s46, %s47
      %p58 = scmp.eq.s32.totalorder %s17, 0
      %p59 = por %p57, %p58
      %p60 = scmp.ne.s32.totalorder %s46, %s47
      %p61 = scmp.eq.s32.totalorder %s18, 2
      %p62 = por %p60, %p61
      %p64 = scmp.ne.s32.totalorder %s47, %s63
      %p65 = scmp.eq.s32.totalorder %s18, 0
      %p66 = por %p64, %p65
      %s67 = ssub.s32 %s12, %s19
      %p68 = scmp.eq.s32.totalorder %s67, 0
      %s70 = sadd.s32 %s69, 1
      %s71 = scalar_select %p68, %s69, %s70
      %p74 = pneg %p68
      %p75 = scmp.eq.s32.totalorder %s12, 2
      %p76 = por %p74, %p75
      %p77 = scmp.ne.s32.totalorder %s69, %s72
      %p78 = scmp.eq.s32.totalorder %s12, 0
      %p79 = por %p77, %p78
      %p80 = scmp.ne.s32.totalorder %s69, %s72
      %p81 = scmp.eq.s32.totalorder %s17, 2
      %p82 = por %p80, %p81
      %p83 = scmp.ne.s32.totalorder %s72, %s73
      %p84 = scmp.eq.s32.totalorder %s17, 0
      %p85 = por %p83, %p84
      %p86 = scmp.ne.s32.totalorder %s72, %s73
      %p87 = scmp.eq.s32.totalorder %s18, 2
      %p88 = por %p86, %p87
      %p90 = scmp.ne.s32.totalorder %s73, %s89
      %p91 = scmp.eq.s32.totalorder %s18, 0
      %p92 = por %p90, %p91
      %s93 = ssub.s32 %s12, %s19
      %p94 = scmp.eq.s32.totalorder %s93, 0
      %s96 = sadd.s32 %s95, 1
      %s97 = scalar_select %p94, %s95, %s96
      %p100 = pneg %p94
      %p101 = scmp.eq.s32.totalorder %s12, 2
      %p102 = por %p100, %p101
      %p103 = scmp.ne.s32.totalorder %s95, %s98
      %p104 = scmp.eq.s32.totalorder %s12, 0
      %p105 = por %p103, %p104
      %p106 = scmp.ne.s32.totalorder %s95, %s98
      %p107 = scmp.eq.s32.totalorder %s17, 2
      %p108 = por %p106, %p107
      %p109 = scmp.ne.s32.totalorder %s98, %s99
      %p110 = scmp.eq.s32.totalorder %s17, 0
      %p111 = por %p109, %p110
      %p112 = scmp.ne.s32.totalorder %s98, %s99
      %p113 = scmp.eq.s32.totalorder %s18, 2
      %p114 = por %p112, %p113
      %p116 = scmp.ne.s32.totalorder %s99, %s115
      %p117 = scmp.eq.s32.totalorder %s18, 0
      %p118 = por %p116, %p117
      %s120 = sadd.s32 %s119, 1
      %p123 = scmp.eq.s32.totalorder %s12, 2
      %p124 = scmp.ne.s32.totalorder %s119, %s121
      %p125 = scmp.eq.s32.totalorder %s12, 0
      %p126 = por %p124, %p125
      %p127 = scmp.ne.s32.totalorder %s119, %s121
      %p128 = scmp.eq.s32.totalorder %s17, 2
      %p129 = por %p127, %p128
      %p130 = scmp.ne.s32.totalorder %s121, %s122
      %p131 = scmp.eq.s32.totalorder %s17, 0
      %p132 = por %p130, %p131
      %p133 = scmp.ne.s32.totalorder %s121, %s122
      %p134 = scmp.eq.s32.totalorder %s18, 2
      %p135 = por %p133, %p134
      %p137 = scmp.ne.s32.totalorder %s122, %s136
      %p138 = scmp.eq.s32.totalorder %s18, 0
      %p139 = por %p137, %p138
      %s141 = sadd.s32 %s140, 1
      %p144 = scmp.eq.s32.totalorder %s12, 2
      %p145 = scmp.ne.s32.totalorder %s140, %s142
      %p146 = scmp.eq.s32.totalorder %s12, 0
      %p147 = por %p145, %p146
      %p148 = scmp.ne.s32.totalorder %s140, %s142
      %p149 = scmp.eq.s32.totalorder %s17, 2
      %p150 = por %p148, %p149
      %p151 = scmp.ne.s32.totalorder %s142, %s143
      %p152 = scmp.eq.s32.totalorder %s17, 0
      %p153 = por %p151, %p152
      %p154 = scmp.ne.s32.totalorder %s142, %s143
      %p155 = scmp.eq.s32.totalorder %s18, 2
      %p156 = por %p154, %p155
      %p158 = scmp.ne.s32.totalorder %s143, %s157
      %p159 = scmp.eq.s32.totalorder %s18, 0
      %p160 = por %p158, %p159
      %p161 = scmp.le.s32.totalorder 1, %s12
      %p162 = scmp.lt.s32.totalorder %s12, 4
      %p163 = pnand %p161, %p162
      %p164 = pneg %p163
      // Predicated region
      $region9: #{cnn_forward.1} parent=5 // pred_check
        _
      $region10: #{cnn_forward.1} parent=5 // pred_check_branch
        %166 = sbr.rel (%p163) target = $region12
      $region11: #{cnn_forward.1} parent=5 // pred_region
        %s167 = ssub.s32 %s12, 1
        // Predicated region
        $region13: #{cnn_forward.1} parent=11 // pred_check
          %p168 = pneg %p33
        $region14: #{cnn_forward.1} parent=11 // pred_check_branch
          %170 = sbr.rel (%p168) target = $region16
        $region15: #{cnn_forward.1} parent=11 // pred_region
          _
        $region16: #{cnn_forward.1} parent=11 // pred_fallthru
          _
        // Predicated region
        $region17: #{cnn_forward.1} parent=11 // pred_check
          %p171 = pneg %p132
        $region18: #{cnn_forward.1} parent=11 // pred_check_branch
          %173 = sbr.rel (%p171) target = $region20
        $region19: #{cnn_forward.1} parent=11 // pred_region
          _
        $region20: #{cnn_forward.1} parent=11 // pred_fallthru
          _
      $region12: #{cnn_forward.1} parent=5 // pred_fallthru
        _
      %p174 = scmp.lt.s32.totalorder %s12, 3
      // Predicated region
      $region21: #{cnn_forward.1} parent=5 // pred_check
        %p175 = pneg %p174
      $region22: #{cnn_forward.1} parent=5 // pred_check_branch
        %177 = sbr.rel (%p175) target = $region24
      $region23: #{cnn_forward.1} parent=5 // pred_region
        // Predicated region
        $region25: #{cnn_forward.1} parent=23 // pred_check
          %p178 = pneg %p53
        $region26: #{cnn_forward.1} parent=23 // pred_check_branch
          %180 = sbr.rel (%p178) target = $region28
        $region27: #{cnn_forward.1} parent=23 // pred_region
          %p181 = scmp.lt.s32.totalorder %s12, 2
          %s182 = scalar_select %p181, %s12, 2
          %s183 = smul.addr %s182, 480
          %s184 = smul.addr %s183, 4
          %s185 = scalar_lea.vmem %s1, %s184
        $region28: #{cnn_forward.1} parent=23 // pred_fallthru
          _
        // Predicated region
        $region29: #{cnn_forward.1} parent=23 // pred_check
          %p186 = pneg %p79
        $region30: #{cnn_forward.1} parent=23 // pred_check_branch
          %188 = sbr.rel (%p186) target = $region32
        $region31: #{cnn_forward.1} parent=23 // pred_region
          %p189 = scmp.lt.s32.totalorder %s12, 2
          %s190 = scalar_select %p189, %s12, 2
          %s191 = smul.addr %s190, 6
          %s192 = scalar_lea.vmem %s2, %s191
        $region32: #{cnn_forward.1} parent=23 // pred_fallthru
          _
        // Predicated region
        $region33: #{cnn_forward.1} parent=23 // pred_check
          %p193 = pneg %p105
        $region34: #{cnn_forward.1} parent=23 // pred_check_branch
          %195 = sbr.rel (%p193) target = $region36
        $region35: #{cnn_forward.1} parent=23 // pred_region
          %p196 = scmp.lt.s32.totalorder %s12, 2
          %s197 = scalar_select %p196, %s12, 2
          %s198 = smul.addr %s197, 6
          %s199 = smul.addr %s198, 2
          %s200 = scalar_lea.vmem %s3, %s199
        $region36: #{cnn_forward.1} parent=23 // pred_fallthru
          _
      $region24: #{cnn_forward.1} parent=5 // pred_fallthru
        _
      %p201 = scmp.le.s32.totalorder 1, %s12
      %p202 = scmp.lt.s32.totalorder %s12, 4
      %p203 = pnand %p201, %p202
      %p204 = pneg %p203
      // Predicated region
      $region37: #{cnn_forward.1} parent=5 // pred_check
        _
      $region38: #{cnn_forward.1} parent=5 // pred_check_branch
        %206 = sbr.rel (%p203) target = $region40
      $region39: #{cnn_forward.1} parent=5 // pred_region
        %s207 = ssub.s32 %s12, 1
        %p208 = pneg %p33
        %p209 = pneg %p30
        %p210 = scmp.lt.s32.totalorder %s17, 2
        %s211 = scalar_select %p210, %s17, 2
        %s212 = smul.addr %s211, 480
        %s213 = smul.addr %s212, 4
        %s214 = scalar_lea.vmem %s1, %s213
        %p215 = pneg %p59
        %p216 = pneg %p56
        %p217 = scmp.lt.s32.totalorder %s17, 2
        %s218 = scalar_select %p217, %s17, 2
        %s219 = smul.addr %s218, 6
        %s220 = scalar_lea.vmem %s2, %s219
        %p221 = pneg %p85
        %p222 = pneg %p82
        %p223 = scmp.lt.s32.totalorder %s17, 2
        %s224 = scalar_select %p223, %s17, 2
        %s225 = smul.addr %s224, 6
        %s226 = smul.addr %s225, 2
        %s227 = scalar_lea.vmem %s3, %s226
        %p228 = pneg %p111
        %p229 = pneg %p108
        %p230 = pneg %p132
        %p231 = pneg %p129
        %p232 = pneg %p153
        %p233 = pneg %p150
        %p234 = scmp.lt.s32.totalorder %s17, 2
        %s235 = scalar_select %p234, %s17, 2
        %s236 = smul.addr %s235, 480
        %s237 = smul.addr %s236, 4
        %s238 = scalar_lea.vmem %s1, %s237
        %p239 = scmp.lt.s32.totalorder %s17, 2
        %s240 = scalar_select %p239, %s17, 2
        %s241 = smul.addr %s240, 6
        %s242 = scalar_lea.vmem %s2, %s241
        %p243 = scmp.lt.s32.totalorder %s17, 2
        %s244 = scalar_select %p243, %s17, 2
        %s245 = smul.addr %s244, 6
        %s246 = smul.addr %s245, 2
        %s247 = scalar_lea.vmem %s3, %s246
        %p249 = scmp.eq.s32.totalorder %s17, 0
        // Predicated region
        $region41: #{cnn_forward.1} parent=39 // pred_check
          %p250 = pneg %p249
        $region42: #{cnn_forward.1} parent=39 // pred_check_branch
          %252 = sbr.rel (%p250) target = $region44
        $region43: #{cnn_forward.1} parent=39 // pred_region
          %vm253 = vcmask 9216
          %254 = vst.msk [vmem:[#allocation2] sm:$0x3] %vm253, 0.0
        $region44: #{cnn_forward.1} parent=39 // pred_fallthru
          _
        %v255 = vld [vmem:[%s0] sm:$0xf]
        %v256 = vld [vmem:[%s0 + $0x4] sm:$0xf]
        %v257 = vld [vmem:[%s0 + $0x8] sm:$0x3]
        %v258 = vld [vmem:[%s0 + $0xc] sm:$0xf]
        %v259 = vld [vmem:[%s0 + $0x10] sm:$0xf]
        %v260 = vld [vmem:[%s0 + $0x14] sm:$0x3]
        %v265 = vunpack.c.l.b16 %v255
        %v266 = vunpack.c.l.b16 %v256
        %v267 = vunpack.c.l.b16 %v258
        %v268 = vunpack.c.l.b16 %v259
        %v269 = vpack.c.b16 %v266, %v265
        %v270 = vpack.c.b16 %v268, %v267
        %v275 = vunpack.c.l.b16 %v257
        %v276 = vunpack.c.l.b16 %v260
        %v277 = vpack.c.b16 %v275, %v275
        %v278 = vpack.c.b16 %v276, %v276
        %vm279 = vsmask.f32 7424
        %v281 = vshrl.u32 %v269, 16
        %v283 = vshll.u32 %v269, 16
        %v285 = vrot.slane %v283, 1
        %v286 = vor.u32 %v281, %v285
        %v288 = vshll.u32 %v277, 16
        %v290 = vrot.slane %v288, 1
        %v291 = vsel %vm279, %v286, %v290
        %v293 = vshrl.u32 %v270, 16
        %v295 = vshll.u32 %v270, 16
        %v297 = vrot.slane %v295, 1
        %v298 = vor.u32 %v293, %v297
        %v300 = vshll.u32 %v278, 16
        %v302 = vrot.slane %v300, 1
        %v303 = vsel %vm279, %v298, %v302
        %vm306 = vcmask 1046528
        %v307 = vrot.slane %v269, 1
        %v308 = vrot.slane %v277, 1
        %v309 = vsel %vm306, %v307, %v308
        %v310 = vrot.slane %v270, 1
        %v311 = vrot.slane %v278, 1
        %v312 = vsel %vm306, %v310, %v311
        %vm315 = vsmask.f32 6400
        %v316 = vrot.slane %v281, 1
        %v317 = vrot.slane %v283, 2
        %v318 = vor.u32 %v316, %v317
        %v319 = vshrl.u32 %v277, 16
        %v321 = vrot.slane %v319, 1
        %v322 = vrot.slane %v288, 2
        %v323 = vor.u32 %v321, %v322
        %v324 = vsel %vm315, %v318, %v323
        %v325 = vrot.slane %v293, 1
        %v326 = vrot.slane %v295, 2
        %v327 = vor.u32 %v325, %v326
        %v328 = vshrl.u32 %v278, 16
        %v330 = vrot.slane %v328, 1
        %v331 = vrot.slane %v300, 2
        %v332 = vor.u32 %v330, %v331
        %v333 = vsel %vm315, %v327, %v332
        %vm336 = vcmask 1045504
        %v337 = vrot.slane %v269, 2
        %v338 = vrot.slane %v277, 2
        %v339 = vsel %vm336, %v337, %v338
        %v340 = vrot.slane %v270, 2
        %v341 = vrot.slane %v278, 2
        %v342 = vsel %vm336, %v340, %v341
        %v345 = vld [vmem:[%s238] sm:$0xff]
        %v346 = vld [vmem:[%s238 + $0x8] sm:$0xff]
        %v347 = vld [vmem:[%s238 + $0x10] sm:$0xff]
        %v348 = vld [vmem:[%s238 + $0x18] sm:$0xff]
        %v349 = vld [vmem:[%s238 + $0x20] sm:$0xff]
        %v350 = vld [vmem:[%s238 + $0x28] sm:$0xff]
        %v351 = vld [vmem:[%s238 + $0x30] sm:$0xff]
        %v352 = vld [vmem:[%s238 + $0x38] sm:$0xff]
        %v353 = vld [vmem:[%s238 + $0x40] sm:$0xff]
        %v354 = vld [vmem:[%s238 + $0x48] sm:$0xff]
        %v355 = vld [vmem:[%s238 + $0x50] sm:$0xff]
        %v356 = vld [vmem:[%s238 + $0x58] sm:$0xff]
        %v357 = vld [vmem:[%s238 + $0x60] sm:$0xff]
        %v358 = vld [vmem:[%s238 + $0x68] sm:$0xff]
        %v359 = vld [vmem:[%s238 + $0x70] sm:$0xff]
        %v360 = vld [vmem:[%s238 + $0x78] sm:$0xff]
        %v361 = vld [vmem:[%s238 + $0x80] sm:$0xff]
        %v362 = vld [vmem:[%s238 + $0x88] sm:$0xff]
        %v363 = vld [vmem:[%s238 + $0x90] sm:$0xff]
        %v364 = vld [vmem:[%s238 + $0x98] sm:$0xff]
        %v365 = vld [vmem:[%s238 + $0xa0] sm:$0xff]
        %v366 = vld [vmem:[%s238 + $0xa8] sm:$0xff]
        %v367 = vld [vmem:[%s238 + $0xb0] sm:$0xff]
        %v368 = vld [vmem:[%s238 + $0xb8] sm:$0xff]
        %v369 = vld [vmem:[%s238 + $0xc0] sm:$0xff]
        %v370 = vld [vmem:[%s238 + $0xc8] sm:$0xff]
        %v371 = vld [vmem:[%s238 + $0xd0] sm:$0xff]
        %v372 = vld [vmem:[%s238 + $0xd8] sm:$0xff]
        %v373 = vld [vmem:[%s238 + $0xe0] sm:$0xff]
        %v374 = vld [vmem:[%s238 + $0xe8] sm:$0xff]
        %v375 = vld [vmem:[%s238 + $0xf0] sm:$0xff]
        %v376 = vld [vmem:[%s238 + $0xf8] sm:$0xff]
        %v377 = vld [vmem:[%s238 + $0x100] sm:$0xff]
        %v378 = vld [vmem:[%s238 + $0x108] sm:$0xff]
        %v379 = vld [vmem:[%s238 + $0x110] sm:$0xff]
        %v380 = vld [vmem:[%s238 + $0x118] sm:$0xff]
        %v381 = vld [vmem:[%s238 + $0x120] sm:$0xff]
        %v382 = vld [vmem:[%s238 + $0x128] sm:$0xff]
        %v383 = vld [vmem:[%s238 + $0x130] sm:$0xff]
        %v384 = vld [vmem:[%s238 + $0x138] sm:$0xff]
        %v385 = vld [vmem:[%s238 + $0x140] sm:$0xff]
        %v386 = vld [vmem:[%s238 + $0x148] sm:$0xff]
        %v387 = vld [vmem:[%s238 + $0x150] sm:$0xff]
        %v388 = vld [vmem:[%s238 + $0x158] sm:$0xff]
        %v389 = vld [vmem:[%s238 + $0x160] sm:$0xff]
        %v390 = vld [vmem:[%s238 + $0x168] sm:$0xff]
        %v391 = vld [vmem:[%s238 + $0x170] sm:$0xff]
        %v392 = vld [vmem:[%s238 + $0x178] sm:$0xff]
        %v393 = vld [vmem:[%s238 + $0x180] sm:$0xff]
        %v394 = vld [vmem:[%s238 + $0x188] sm:$0xff]
        %v395 = vld [vmem:[%s238 + $0x190] sm:$0xff]
        %v396 = vld [vmem:[%s238 + $0x198] sm:$0xff]
        %v397 = vld [vmem:[%s238 + $0x1a0] sm:$0xff]
        %v398 = vld [vmem:[%s238 + $0x1a8] sm:$0xff]
        %v399 = vld [vmem:[%s238 + $0x1b0] sm:$0xff]
        %v400 = vld [vmem:[%s238 + $0x1b8] sm:$0xff]
        %v401 = vld [vmem:[%s238 + $0x1c0] sm:$0xff]
        %v402 = vld [vmem:[%s238 + $0x1c8] sm:$0xff]
        %v403 = vld [vmem:[%s238 + $0x1d0] sm:$0xff]
        %v404 = vld [vmem:[%s238 + $0x1d8] sm:$0xff]
        %v405 = vld [vmem:[%s238 + $0x1e0] sm:$0xff]
        %v406 = vld [vmem:[%s238 + $0x1e8] sm:$0xff]
        %v407 = vld [vmem:[%s238 + $0x1f0] sm:$0xff]
        %v408 = vld [vmem:[%s238 + $0x1f8] sm:$0xff]
        %v409 = vld [vmem:[%s238 + $0x200] sm:$0xff]
        %v410 = vld [vmem:[%s238 + $0x208] sm:$0xff]
        %v411 = vld [vmem:[%s238 + $0x210] sm:$0xff]
        %v412 = vld [vmem:[%s238 + $0x218] sm:$0xff]
        %v413 = vld [vmem:[%s238 + $0x220] sm:$0xff]
        %v414 = vld [vmem:[%s238 + $0x228] sm:$0xff]
        %v415 = vld [vmem:[%s238 + $0x230] sm:$0xff]
        %v416 = vld [vmem:[%s238 + $0x238] sm:$0xff]
        %v417 = vld [vmem:[%s238 + $0x240] sm:$0xff]
        %v418 = vld [vmem:[%s238 + $0x248] sm:$0xff]
        %v419 = vld [vmem:[%s238 + $0x250] sm:$0xff]
        %v420 = vld [vmem:[%s238 + $0x258] sm:$0xff]
        %v421 = vld [vmem:[%s238 + $0x260] sm:$0xff]
        %v422 = vld [vmem:[%s238 + $0x268] sm:$0xff]
        %v423 = vld [vmem:[%s238 + $0x270] sm:$0xff]
        %v424 = vld [vmem:[%s238 + $0x278] sm:$0xff]
        %v425 = vld [vmem:[%s238 + $0x280] sm:$0xff]
        %v426 = vld [vmem:[%s238 + $0x288] sm:$0xff]
        %v427 = vld [vmem:[%s238 + $0x290] sm:$0xff]
        %v428 = vld [vmem:[%s238 + $0x298] sm:$0xff]
        %v429 = vld [vmem:[%s238 + $0x2a0] sm:$0xff]
        %v430 = vld [vmem:[%s238 + $0x2a8] sm:$0xff]
        %v431 = vld [vmem:[%s238 + $0x2b0] sm:$0xff]
        %v432 = vld [vmem:[%s238 + $0x2b8] sm:$0xff]
        %v433 = vld [vmem:[%s238 + $0x2c0] sm:$0xff]
        %v434 = vld [vmem:[%s238 + $0x2c8] sm:$0xff]
        %v435 = vld [vmem:[%s238 + $0x2d0] sm:$0xff]
        %v436 = vld [vmem:[%s238 + $0x2d8] sm:$0xff]
        %v437 = vld [vmem:[%s238 + $0x2e0] sm:$0xff]
        %v438 = vld [vmem:[%s238 + $0x2e8] sm:$0xff]
        %v439 = vld [vmem:[%s238 + $0x2f0] sm:$0xff]
        %v440 = vld [vmem:[%s238 + $0x2f8] sm:$0xff]
        %v441 = vld [vmem:[%s238 + $0x300] sm:$0xff]
        %v442 = vld [vmem:[%s238 + $0x308] sm:$0xff]
        %v443 = vld [vmem:[%s238 + $0x310] sm:$0xff]
        %v444 = vld [vmem:[%s238 + $0x318] sm:$0xff]
        %v445 = vld [vmem:[%s238 + $0x320] sm:$0xff]
        %v446 = vld [vmem:[%s238 + $0x328] sm:$0xff]
        %v447 = vld [vmem:[%s238 + $0x330] sm:$0xff]
        %v448 = vld [vmem:[%s238 + $0x338] sm:$0xff]
        %v449 = vld [vmem:[%s238 + $0x340] sm:$0xff]
        %v450 = vld [vmem:[%s238 + $0x348] sm:$0xff]
        %v451 = vld [vmem:[%s238 + $0x350] sm:$0xff]
        %v452 = vld [vmem:[%s238 + $0x358] sm:$0xff]
        %v453 = vld [vmem:[%s238 + $0x360] sm:$0xff]
        %v454 = vld [vmem:[%s238 + $0x368] sm:$0xff]
        %v455 = vld [vmem:[%s238 + $0x370] sm:$0xff]
        %v456 = vld [vmem:[%s238 + $0x378] sm:$0xff]
        %v457 = vld [vmem:[%s238 + $0x380] sm:$0xff]
        %v458 = vld [vmem:[%s238 + $0x388] sm:$0xff]
        %v459 = vld [vmem:[%s238 + $0x390] sm:$0xff]
        %v460 = vld [vmem:[%s238 + $0x398] sm:$0xff]
        %v461 = vld [vmem:[%s238 + $0x3a0] sm:$0xff]
        %v462 = vld [vmem:[%s238 + $0x3a8] sm:$0xff]
        %v463 = vld [vmem:[%s238 + $0x3b0] sm:$0xff]
        %v464 = vld [vmem:[%s238 + $0x3b8] sm:$0xff]
        %v465 = vld [vmem:[%s238 + $0x3c0] sm:$0xff]
        %v466 = vld [vmem:[%s238 + $0x3c8] sm:$0xff]
        %v467 = vld [vmem:[%s238 + $0x3d0] sm:$0xff]
        %v468 = vld [vmem:[%s238 + $0x3d8] sm:$0xff]
        %v469 = vld [vmem:[%s238 + $0x3e0] sm:$0xff]
        %v470 = vld [vmem:[%s238 + $0x3e8] sm:$0xff]
        %v471 = vld [vmem:[%s238 + $0x3f0] sm:$0xff]
        %v472 = vld [vmem:[%s238 + $0x3f8] sm:$0xff]
        %v473 = vld [vmem:[%s238 + $0x400] sm:$0xff]
        %v474 = vld [vmem:[%s238 + $0x408] sm:$0xff]
        %v475 = vld [vmem:[%s238 + $0x410] sm:$0xff]
        %v476 = vld [vmem:[%s238 + $0x418] sm:$0xff]
        %v477 = vld [vmem:[%s238 + $0x420] sm:$0xff]
        %v478 = vld [vmem:[%s238 + $0x428] sm:$0xff]
        %v479 = vld [vmem:[%s238 + $0x430] sm:$0xff]
        %v480 = vld [vmem:[%s238 + $0x438] sm:$0xff]
        %v481 = vld [vmem:[%s238 + $0x440] sm:$0xff]
        %v482 = vld [vmem:[%s238 + $0x448] sm:$0xff]
        %v483 = vld [vmem:[%s238 + $0x450] sm:$0xff]
        %v484 = vld [vmem:[%s238 + $0x458] sm:$0xff]
        %v485 = vld [vmem:[%s238 + $0x460] sm:$0xff]
        %v486 = vld [vmem:[%s238 + $0x468] sm:$0xff]
        %v487 = vld [vmem:[%s238 + $0x470] sm:$0xff]
        %v488 = vld [vmem:[%s238 + $0x478] sm:$0xff]
        %v489 = vld [vmem:[%s238 + $0x480] sm:$0xff]
        %v490 = vld [vmem:[%s238 + $0x488] sm:$0xff]
        %v491 = vld [vmem:[%s238 + $0x490] sm:$0xff]
        %v492 = vld [vmem:[%s238 + $0x498] sm:$0xff]
        %v493 = vld [vmem:[%s238 + $0x4a0] sm:$0xff]
        %v494 = vld [vmem:[%s238 + $0x4a8] sm:$0xff]
        %v495 = vld [vmem:[%s238 + $0x4b0] sm:$0xff]
        %v496 = vld [vmem:[%s238 + $0x4b8] sm:$0xff]
        %v497 = vld [vmem:[%s238 + $0x4c0] sm:$0xff]
        %v498 = vld [vmem:[%s238 + $0x4c8] sm:$0xff]
        %v499 = vld [vmem:[%s238 + $0x4d0] sm:$0xff]
        %v500 = vld [vmem:[%s238 + $0x4d8] sm:$0xff]
        %v501 = vld [vmem:[%s238 + $0x4e0] sm:$0xff]
        %v502 = vld [vmem:[%s238 + $0x4e8] sm:$0xff]
        %v503 = vld [vmem:[%s238 + $0x4f0] sm:$0xff]
        %v504 = vld [vmem:[%s238 + $0x4f8] sm:$0xff]
        %v505 = vld [vmem:[%s238 + $0x500] sm:$0xff]
        %v506 = vld [vmem:[%s238 + $0x508] sm:$0xff]
        %v507 = vld [vmem:[%s238 + $0x510] sm:$0xff]
        %v508 = vld [vmem:[%s238 + $0x518] sm:$0xff]
        %v509 = vld [vmem:[%s238 + $0x520] sm:$0xff]
        %v510 = vld [vmem:[%s238 + $0x528] sm:$0xff]
        %v511 = vld [vmem:[%s238 + $0x530] sm:$0xff]
        %v512 = vld [vmem:[%s238 + $0x538] sm:$0xff]
        %v513 = vld [vmem:[%s238 + $0x540] sm:$0xff]
        %v514 = vld [vmem:[%s238 + $0x548] sm:$0xff]
        %v515 = vld [vmem:[%s238 + $0x550] sm:$0xff]
        %v516 = vld [vmem:[%s238 + $0x558] sm:$0xff]
        %v517 = vld [vmem:[%s238 + $0x560] sm:$0xff]
        %v518 = vld [vmem:[%s238 + $0x568] sm:$0xff]
        %v519 = vld [vmem:[%s238 + $0x570] sm:$0xff]
        %v520 = vld [vmem:[%s238 + $0x578] sm:$0xff]
        %v521 = vld [vmem:[%s238 + $0x580] sm:$0xff]
        %v522 = vld [vmem:[%s238 + $0x588] sm:$0xff]
        %v523 = vld [vmem:[%s238 + $0x590] sm:$0xff]
        %v524 = vld [vmem:[%s238 + $0x598] sm:$0xff]
        %v525 = vld [vmem:[%s238 + $0x5a0] sm:$0xff]
        %v526 = vld [vmem:[%s238 + $0x5a8] sm:$0xff]
        %v527 = vld [vmem:[%s238 + $0x5b0] sm:$0xff]
        %v528 = vld [vmem:[%s238 + $0x5b8] sm:$0xff]
        %v529 = vld [vmem:[%s238 + $0x5c0] sm:$0xff]
        %v530 = vld [vmem:[%s238 + $0x5c8] sm:$0xff]
        %v531 = vld [vmem:[%s238 + $0x5d0] sm:$0xff]
        %v532 = vld [vmem:[%s238 + $0x5d8] sm:$0xff]
        %v533 = vld [vmem:[%s238 + $0x5e0] sm:$0xff]
        %v534 = vld [vmem:[%s238 + $0x5e8] sm:$0xff]
        %v535 = vld [vmem:[%s238 + $0x5f0] sm:$0xff]
        %v536 = vld [vmem:[%s238 + $0x5f8] sm:$0xff]
        %v537 = vld [vmem:[%s238 + $0x600] sm:$0xff]
        %v538 = vld [vmem:[%s238 + $0x608] sm:$0xff]
        %v539 = vld [vmem:[%s238 + $0x610] sm:$0xff]
        %v540 = vld [vmem:[%s238 + $0x618] sm:$0xff]
        %v541 = vld [vmem:[%s238 + $0x620] sm:$0xff]
        %v542 = vld [vmem:[%s238 + $0x628] sm:$0xff]
        %v543 = vld [vmem:[%s238 + $0x630] sm:$0xff]
        %v544 = vld [vmem:[%s238 + $0x638] sm:$0xff]
        %v545 = vld [vmem:[%s238 + $0x640] sm:$0xff]
        %v546 = vld [vmem:[%s238 + $0x648] sm:$0xff]
        %v547 = vld [vmem:[%s238 + $0x650] sm:$0xff]
        %v548 = vld [vmem:[%s238 + $0x658] sm:$0xff]
        %v549 = vld [vmem:[%s238 + $0x660] sm:$0xff]
        %v550 = vld [vmem:[%s238 + $0x668] sm:$0xff]
        %v551 = vld [vmem:[%s238 + $0x670] sm:$0xff]
        %v552 = vld [vmem:[%s238 + $0x678] sm:$0xff]
        %v553 = vld [vmem:[%s238 + $0x680] sm:$0xff]
        %v554 = vld [vmem:[%s238 + $0x688] sm:$0xff]
        %v555 = vld [vmem:[%s238 + $0x690] sm:$0xff]
        %v556 = vld [vmem:[%s238 + $0x698] sm:$0xff]
        %v557 = vld [vmem:[%s238 + $0x6a0] sm:$0xff]
        %v558 = vld [vmem:[%s238 + $0x6a8] sm:$0xff]
        %v559 = vld [vmem:[%s238 + $0x6b0] sm:$0xff]
        %v560 = vld [vmem:[%s238 + $0x6b8] sm:$0xff]
        %v561 = vld [vmem:[%s238 + $0x6c0] sm:$0xff]
        %v562 = vld [vmem:[%s238 + $0x6c8] sm:$0xff]
        %v563 = vld [vmem:[%s238 + $0x6d0] sm:$0xff]
        %v564 = vld [vmem:[%s238 + $0x6d8] sm:$0xff]
        %v565 = vld [vmem:[%s238 + $0x6e0] sm:$0xff]
        %v566 = vld [vmem:[%s238 + $0x6e8] sm:$0xff]
        %v567 = vld [vmem:[%s238 + $0x6f0] sm:$0xff]
        %v568 = vld [vmem:[%s238 + $0x6f8] sm:$0xff]
        %v569 = vld [vmem:[%s238 + $0x700] sm:$0xff]
        %v570 = vld [vmem:[%s238 + $0x708] sm:$0xff]
        %v571 = vld [vmem:[%s238 + $0x710] sm:$0xff]
        %v572 = vld [vmem:[%s238 + $0x718] sm:$0xff]
        %v573 = vld [vmem:[%s238 + $0x720] sm:$0xff]
        %v574 = vld [vmem:[%s238 + $0x728] sm:$0xff]
        %v575 = vld [vmem:[%s238 + $0x730] sm:$0xff]
        %v576 = vld [vmem:[%s238 + $0x738] sm:$0xff]
        %v577 = vld [vmem:[%s238 + $0x740] sm:$0xff]
        %v578 = vld [vmem:[%s238 + $0x748] sm:$0xff]
        %v579 = vld [vmem:[%s238 + $0x750] sm:$0xff]
        %v580 = vld [vmem:[%s238 + $0x758] sm:$0xff]
        %v581 = vld [vmem:[%s238 + $0x760] sm:$0xff]
        %v582 = vld [vmem:[%s238 + $0x768] sm:$0xff]
        %v583 = vld [vmem:[%s238 + $0x770] sm:$0xff]
        %v584 = vld [vmem:[%s238 + $0x778] sm:$0xff]
        %v585 = vld [vmem:[%s242] sm:$0x3f]
        %v587 = vlaneseq
        %v588 = vshrl.u32 %v587, 7
        %v589 = vsub.s32 0, %v588
        %v590 = vrot.slane %v585, %v589
        %v591 = vlaneseq
        %v592 = vshrl.u32 %v591, 7
        %v593 = vsub.s32 1, %v592
        %v594 = vrot.slane %v585, %v593
        %v595 = vlaneseq
        %v596 = vshrl.u32 %v595, 7
        %v597 = vsub.s32 2, %v596
        %v598 = vrot.slane %v585, %v597
        %v599 = vlaneseq
        %v600 = vshrl.u32 %v599, 7
        %v601 = vsub.s32 3, %v600
        %v602 = vrot.slane %v585, %v601
        %v603 = vlaneseq
        %v604 = vshrl.u32 %v603, 7
        %v605 = vsub.s32 4, %v604
        %v606 = vrot.slane %v585, %v605
        %v607 = vlaneseq
        %v608 = vshrl.u32 %v607, 7
        %v609 = vsub.s32 5, %v608
        %v610 = vrot.slane %v585, %v609
        %v857 = vunpack.c.l.b16 %v345
        %v858 = vunpack.c.h.b16 %v345
        %v859 = vunpack.c.l.b16 %v346
        %v860 = vunpack.c.h.b16 %v346
        %v861 = vunpack.c.l.b16 %v347
        %v862 = vunpack.c.h.b16 %v347
        %v863 = vunpack.c.l.b16 %v348
        %v864 = vunpack.c.h.b16 %v348
        %v865 = vunpack.c.l.b16 %v349
        %v866 = vunpack.c.h.b16 %v349
        %v867 = vunpack.c.l.b16 %v350
        %v868 = vunpack.c.h.b16 %v350
        %v869 = vunpack.c.l.b16 %v351
        %v870 = vunpack.c.h.b16 %v351
        %v871 = vunpack.c.l.b16 %v352
        %v872 = vunpack.c.h.b16 %v352
        %v873 = vunpack.c.l.b16 %v353
        %v874 = vunpack.c.h.b16 %v353
        %v875 = vunpack.c.l.b16 %v354
        %v876 = vunpack.c.h.b16 %v354
        %v877 = vunpack.c.l.b16 %v355
        %v878 = vunpack.c.h.b16 %v355
        %v879 = vunpack.c.l.b16 %v356
        %v880 = vunpack.c.h.b16 %v356
        %v881 = vunpack.c.l.b16 %v357
        %v882 = vunpack.c.h.b16 %v357
        %v883 = vunpack.c.l.b16 %v358
        %v884 = vunpack.c.h.b16 %v358
        %v885 = vunpack.c.l.b16 %v359
        %v886 = vunpack.c.h.b16 %v359
        %v887 = vunpack.c.l.b16 %v360
        %v888 = vunpack.c.h.b16 %v360
        %v889 = vunpack.c.l.b16 %v361
        %v890 = vunpack.c.h.b16 %v361
        %v891 = vunpack.c.l.b16 %v362
        %v892 = vunpack.c.h.b16 %v362
        %v893 = vunpack.c.l.b16 %v363
        %v894 = vunpack.c.h.b16 %v363
        %v895 = vunpack.c.l.b16 %v364
        %v896 = vunpack.c.h.b16 %v364
        %v897 = vunpack.c.l.b16 %v365
        %v898 = vunpack.c.h.b16 %v365
        %v899 = vunpack.c.l.b16 %v366
        %v900 = vunpack.c.h.b16 %v366
        %v901 = vunpack.c.l.b16 %v367
        %v902 = vunpack.c.h.b16 %v367
        %v903 = vunpack.c.l.b16 %v368
        %v904 = vunpack.c.h.b16 %v368
        %v905 = vunpack.c.l.b16 %v369
        %v906 = vunpack.c.h.b16 %v369
        %v907 = vunpack.c.l.b16 %v370
        %v908 = vunpack.c.h.b16 %v370
        %v909 = vunpack.c.l.b16 %v371
        %v910 = vunpack.c.h.b16 %v371
        %v911 = vunpack.c.l.b16 %v372
        %v912 = vunpack.c.h.b16 %v372
        %v913 = vunpack.c.l.b16 %v373
        %v914 = vunpack.c.h.b16 %v373
        %v915 = vunpack.c.l.b16 %v374
        %v916 = vunpack.c.h.b16 %v374
        %v917 = vunpack.c.l.b16 %v375
        %v918 = vunpack.c.h.b16 %v375
        %v919 = vunpack.c.l.b16 %v376
        %v920 = vunpack.c.h.b16 %v376
        %v921 = vunpack.c.l.b16 %v377
        %v922 = vunpack.c.h.b16 %v377
        %v923 = vunpack.c.l.b16 %v378
        %v924 = vunpack.c.h.b16 %v378
        %v925 = vunpack.c.l.b16 %v379
        %v926 = vunpack.c.h.b16 %v379
        %v927 = vunpack.c.l.b16 %v380
        %v928 = vunpack.c.h.b16 %v380
        %v929 = vunpack.c.l.b16 %v381
        %v930 = vunpack.c.h.b16 %v381
        %v931 = vunpack.c.l.b16 %v382
        %v932 = vunpack.c.h.b16 %v382
        %v933 = vunpack.c.l.b16 %v383
        %v934 = vunpack.c.h.b16 %v383
        %v935 = vunpack.c.l.b16 %v384
        %v936 = vunpack.c.h.b16 %v384
        %v937 = vunpack.c.l.b16 %v385
        %v938 = vunpack.c.h.b16 %v385
        %v939 = vunpack.c.l.b16 %v386
        %v940 = vunpack.c.h.b16 %v386
        %v941 = vunpack.c.l.b16 %v387
        %v942 = vunpack.c.h.b16 %v387
        %v943 = vunpack.c.l.b16 %v388
        %v944 = vunpack.c.h.b16 %v388
        %v945 = vunpack.c.l.b16 %v389
        %v946 = vunpack.c.h.b16 %v389
        %v947 = vunpack.c.l.b16 %v390
        %v948 = vunpack.c.h.b16 %v390
        %v949 = vunpack.c.l.b16 %v391
        %v950 = vunpack.c.h.b16 %v391
        %v951 = vunpack.c.l.b16 %v392
        %v952 = vunpack.c.h.b16 %v392
        %v953 = vunpack.c.l.b16 %v393
        %v954 = vunpack.c.h.b16 %v393
        %v955 = vunpack.c.l.b16 %v394
        %v956 = vunpack.c.h.b16 %v394
        %v957 = vunpack.c.l.b16 %v395
        %v958 = vunpack.c.h.b16 %v395
        %v959 = vunpack.c.l.b16 %v396
        %v960 = vunpack.c.h.b16 %v396
        %v961 = vunpack.c.l.b16 %v397
        %v962 = vunpack.c.h.b16 %v397
        %v963 = vunpack.c.l.b16 %v398
        %v964 = vunpack.c.h.b16 %v398
        %v965 = vunpack.c.l.b16 %v399
        %v966 = vunpack.c.h.b16 %v399
        %v967 = vunpack.c.l.b16 %v400
        %v968 = vunpack.c.h.b16 %v400
        %v969 = vunpack.c.l.b16 %v401
        %v970 = vunpack.c.h.b16 %v401
        %v971 = vunpack.c.l.b16 %v402
        %v972 = vunpack.c.h.b16 %v402
        %v973 = vunpack.c.l.b16 %v403
        %v974 = vunpack.c.h.b16 %v403
        %v975 = vunpack.c.l.b16 %v404
        %v976 = vunpack.c.h.b16 %v404
        %v977 = vunpack.c.l.b16 %v405
        %v978 = vunpack.c.h.b16 %v405
        %v979 = vunpack.c.l.b16 %v406
        %v980 = vunpack.c.h.b16 %v406
        %v981 = vunpack.c.l.b16 %v407
        %v982 = vunpack.c.h.b16 %v407
        %v983 = vunpack.c.l.b16 %v408
        %v984 = vunpack.c.h.b16 %v408
        %v985 = vunpack.c.l.b16 %v409
        %v986 = vunpack.c.h.b16 %v409
        %v987 = vunpack.c.l.b16 %v410
        %v988 = vunpack.c.h.b16 %v410
        %v989 = vunpack.c.l.b16 %v411
        %v990 = vunpack.c.h.b16 %v411
        %v991 = vunpack.c.l.b16 %v412
        %v992 = vunpack.c.h.b16 %v412
        %v993 = vunpack.c.l.b16 %v413
        %v994 = vunpack.c.h.b16 %v413
        %v995 = vunpack.c.l.b16 %v414
        %v996 = vunpack.c.h.b16 %v414
        %v997 = vunpack.c.l.b16 %v415
        %v998 = vunpack.c.h.b16 %v415
        %v999 = vunpack.c.l.b16 %v416
        %v1000 = vunpack.c.h.b16 %v416
        %v1001 = vunpack.c.l.b16 %v417
        %v1002 = vunpack.c.h.b16 %v417
        %v1003 = vunpack.c.l.b16 %v418
        %v1004 = vunpack.c.h.b16 %v418
        %v1005 = vunpack.c.l.b16 %v419
        %v1006 = vunpack.c.h.b16 %v419
        %v1007 = vunpack.c.l.b16 %v420
        %v1008 = vunpack.c.h.b16 %v420
        %v1009 = vunpack.c.l.b16 %v421
        %v1010 = vunpack.c.h.b16 %v421
        %v1011 = vunpack.c.l.b16 %v422
        %v1012 = vunpack.c.h.b16 %v422
        %v1013 = vunpack.c.l.b16 %v423
        %v1014 = vunpack.c.h.b16 %v423
        %v1015 = vunpack.c.l.b16 %v424
        %v1016 = vunpack.c.h.b16 %v424
        %v1017 = vunpack.c.l.b16 %v425
        %v1018 = vunpack.c.h.b16 %v425
        %v1019 = vunpack.c.l.b16 %v426
        %v1020 = vunpack.c.h.b16 %v426
        %v1021 = vunpack.c.l.b16 %v427
        %v1022 = vunpack.c.h.b16 %v427
        %v1023 = vunpack.c.l.b16 %v428
        %v1024 = vunpack.c.h.b16 %v428
        %v1025 = vunpack.c.l.b16 %v429
        %v1026 = vunpack.c.h.b16 %v429
        %v1027 = vunpack.c.l.b16 %v430
        %v1028 = vunpack.c.h.b16 %v430
        %v1029 = vunpack.c.l.b16 %v431
        %v1030 = vunpack.c.h.b16 %v431
        %v1031 = vunpack.c.l.b16 %v432
        %v1032 = vunpack.c.h.b16 %v432
        %v1033 = vunpack.c.l.b16 %v433
        %v1034 = vunpack.c.h.b16 %v433
        %v1035 = vunpack.c.l.b16 %v434
        %v1036 = vunpack.c.h.b16 %v434
        %v1037 = vunpack.c.l.b16 %v435
        %v1038 = vunpack.c.h.b16 %v435
        %v1039 = vunpack.c.l.b16 %v436
        %v1040 = vunpack.c.h.b16 %v436
        %v1041 = vunpack.c.l.b16 %v437
        %v1042 = vunpack.c.h.b16 %v437
        %v1043 = vunpack.c.l.b16 %v438
        %v1044 = vunpack.c.h.b16 %v438
        %v1045 = vunpack.c.l.b16 %v439
        %v1046 = vunpack.c.h.b16 %v439
        %v1047 = vunpack.c.l.b16 %v440
        %v1048 = vunpack.c.h.b16 %v440
        %v1049 = vunpack.c.l.b16 %v441
        %v1050 = vunpack.c.h.b16 %v441
        %v1051 = vunpack.c.l.b16 %v442
        %v1052 = vunpack.c.h.b16 %v442
        %v1053 = vunpack.c.l.b16 %v443
        %v1054 = vunpack.c.h.b16 %v443
        %v1055 = vunpack.c.l.b16 %v444
        %v1056 = vunpack.c.h.b16 %v444
        %v1057 = vunpack.c.l.b16 %v445
        %v1058 = vunpack.c.h.b16 %v445
        %v1059 = vunpack.c.l.b16 %v446
        %v1060 = vunpack.c.h.b16 %v446
        %v1061 = vunpack.c.l.b16 %v447
        %v1062 = vunpack.c.h.b16 %v447
        %v1063 = vunpack.c.l.b16 %v448
        %v1064 = vunpack.c.h.b16 %v448
        %v1065 = vunpack.c.l.b16 %v449
        %v1066 = vunpack.c.h.b16 %v449
        %v1067 = vunpack.c.l.b16 %v450
        %v1068 = vunpack.c.h.b16 %v450
        %v1069 = vunpack.c.l.b16 %v451
        %v1070 = vunpack.c.h.b16 %v451
        %v1071 = vunpack.c.l.b16 %v452
        %v1072 = vunpack.c.h.b16 %v452
        %v1073 = vunpack.c.l.b16 %v453
        %v1074 = vunpack.c.h.b16 %v453
        %v1075 = vunpack.c.l.b16 %v454
        %v1076 = vunpack.c.h.b16 %v454
        %v1077 = vunpack.c.l.b16 %v455
        %v1078 = vunpack.c.h.b16 %v455
        %v1079 = vunpack.c.l.b16 %v456
        %v1080 = vunpack.c.h.b16 %v456
        %v1081 = vunpack.c.l.b16 %v457
        %v1082 = vunpack.c.h.b16 %v457
        %v1083 = vunpack.c.l.b16 %v458
        %v1084 = vunpack.c.h.b16 %v458
        %v1085 = vunpack.c.l.b16 %v459
        %v1086 = vunpack.c.h.b16 %v459
        %v1087 = vunpack.c.l.b16 %v460
        %v1088 = vunpack.c.h.b16 %v460
        %v1089 = vunpack.c.l.b16 %v461
        %v1090 = vunpack.c.h.b16 %v461
        %v1091 = vunpack.c.l.b16 %v462
        %v1092 = vunpack.c.h.b16 %v462
        %v1093 = vunpack.c.l.b16 %v463
        %v1094 = vunpack.c.h.b16 %v463
        %v1095 = vunpack.c.l.b16 %v464
        %v1096 = vunpack.c.h.b16 %v464
        %v1097 = vunpack.c.l.b16 %v465
        %v1098 = vunpack.c.h.b16 %v465
        %v1099 = vunpack.c.l.b16 %v466
        %v1100 = vunpack.c.h.b16 %v466
        %v1101 = vunpack.c.l.b16 %v467
        %v1102 = vunpack.c.h.b16 %v467
        %v1103 = vunpack.c.l.b16 %v468
        %v1104 = vunpack.c.h.b16 %v468
        %v1105 = vunpack.c.l.b16 %v469
        %v1106 = vunpack.c.h.b16 %v469
        %v1107 = vunpack.c.l.b16 %v470
        %v1108 = vunpack.c.h.b16 %v470
        %v1109 = vunpack.c.l.b16 %v471
        %v1110 = vunpack.c.h.b16 %v471
        %v1111 = vunpack.c.l.b16 %v472
        %v1112 = vunpack.c.h.b16 %v472
        %v1113 = vunpack.c.l.b16 %v473
        %v1114 = vunpack.c.h.b16 %v473
        %v1115 = vunpack.c.l.b16 %v474
        %v1116 = vunpack.c.h.b16 %v474
        %v1117 = vunpack.c.l.b16 %v475
        %v1118 = vunpack.c.h.b16 %v475
        %v1119 = vunpack.c.l.b16 %v476
        %v1120 = vunpack.c.h.b16 %v476
        %v1121 = vunpack.c.l.b16 %v477
        %v1122 = vunpack.c.h.b16 %v477
        %v1123 = vunpack.c.l.b16 %v478
        %v1124 = vunpack.c.h.b16 %v478
        %v1125 = vunpack.c.l.b16 %v479
        %v1126 = vunpack.c.h.b16 %v479
        %v1127 = vunpack.c.l.b16 %v480
        %v1128 = vunpack.c.h.b16 %v480
        %v1129 = vunpack.c.l.b16 %v481
        %v1130 = vunpack.c.h.b16 %v481
        %v1131 = vunpack.c.l.b16 %v482
        %v1132 = vunpack.c.h.b16 %v482
        %v1133 = vunpack.c.l.b16 %v483
        %v1134 = vunpack.c.h.b16 %v483
        %v1135 = vunpack.c.l.b16 %v484
        %v1136 = vunpack.c.h.b16 %v484
        %v1137 = vunpack.c.l.b16 %v485
        %v1138 = vunpack.c.h.b16 %v485
        %v1139 = vunpack.c.l.b16 %v486
        %v1140 = vunpack.c.h.b16 %v486
        %v1141 = vunpack.c.l.b16 %v487
        %v1142 = vunpack.c.h.b16 %v487
        %v1143 = vunpack.c.l.b16 %v488
        %v1144 = vunpack.c.h.b16 %v488
        %v1145 = vunpack.c.l.b16 %v489
        %v1146 = vunpack.c.h.b16 %v489
        %v1147 = vunpack.c.l.b16 %v490
        %v1148 = vunpack.c.h.b16 %v490
        %v1149 = vunpack.c.l.b16 %v491
        %v1150 = vunpack.c.h.b16 %v491
        %v1151 = vunpack.c.l.b16 %v492
        %v1152 = vunpack.c.h.b16 %v492
        %v1153 = vunpack.c.l.b16 %v493
        %v1154 = vunpack.c.h.b16 %v493
        %v1155 = vunpack.c.l.b16 %v494
        %v1156 = vunpack.c.h.b16 %v494
        %v1157 = vunpack.c.l.b16 %v495
        %v1158 = vunpack.c.h.b16 %v495
        %v1159 = vunpack.c.l.b16 %v496
        %v1160 = vunpack.c.h.b16 %v496
        %v1161 = vunpack.c.l.b16 %v497
        %v1162 = vunpack.c.h.b16 %v497
        %v1163 = vunpack.c.l.b16 %v498
        %v1164 = vunpack.c.h.b16 %v498
        %v1165 = vunpack.c.l.b16 %v499
        %v1166 = vunpack.c.h.b16 %v499
        %v1167 = vunpack.c.l.b16 %v500
        %v1168 = vunpack.c.h.b16 %v500
        %v1169 = vunpack.c.l.b16 %v501
        %v1170 = vunpack.c.h.b16 %v501
        %v1171 = vunpack.c.l.b16 %v502
        %v1172 = vunpack.c.h.b16 %v502
        %v1173 = vunpack.c.l.b16 %v503
        %v1174 = vunpack.c.h.b16 %v503
        %v1175 = vunpack.c.l.b16 %v504
        %v1176 = vunpack.c.h.b16 %v504
        %v1177 = vunpack.c.l.b16 %v505
        %v1178 = vunpack.c.h.b16 %v505
        %v1179 = vunpack.c.l.b16 %v506
        %v1180 = vunpack.c.h.b16 %v506
        %v1181 = vunpack.c.l.b16 %v507
        %v1182 = vunpack.c.h.b16 %v507
        %v1183 = vunpack.c.l.b16 %v508
        %v1184 = vunpack.c.h.b16 %v508
        %v1185 = vunpack.c.l.b16 %v509
        %v1186 = vunpack.c.h.b16 %v509
        %v1187 = vunpack.c.l.b16 %v510
        %v1188 = vunpack.c.h.b16 %v510
        %v1189 = vunpack.c.l.b16 %v511
        %v1190 = vunpack.c.h.b16 %v511
        %v1191 = vunpack.c.l.b16 %v512
        %v1192 = vunpack.c.h.b16 %v512
        %v1193 = vunpack.c.l.b16 %v513
        %v1194 = vunpack.c.h.b16 %v513
        %v1195 = vunpack.c.l.b16 %v514
        %v1196 = vunpack.c.h.b16 %v514
        %v1197 = vunpack.c.l.b16 %v515
        %v1198 = vunpack.c.h.b16 %v515
        %v1199 = vunpack.c.l.b16 %v516
        %v1200 = vunpack.c.h.b16 %v516
        %v1201 = vunpack.c.l.b16 %v517
        %v1202 = vunpack.c.h.b16 %v517
        %v1203 = vunpack.c.l.b16 %v518
        %v1204 = vunpack.c.h.b16 %v518
        %v1205 = vunpack.c.l.b16 %v519
        %v1206 = vunpack.c.h.b16 %v519
        %v1207 = vunpack.c.l.b16 %v520
        %v1208 = vunpack.c.h.b16 %v520
        %v1209 = vunpack.c.l.b16 %v521
        %v1210 = vunpack.c.h.b16 %v521
        %v1211 = vunpack.c.l.b16 %v522
        %v1212 = vunpack.c.h.b16 %v522
        %v1213 = vunpack.c.l.b16 %v523
        %v1214 = vunpack.c.h.b16 %v523
        %v1215 = vunpack.c.l.b16 %v524
        %v1216 = vunpack.c.h.b16 %v524
        %v1217 = vunpack.c.l.b16 %v525
        %v1218 = vunpack.c.h.b16 %v525
        %v1219 = vunpack.c.l.b16 %v526
        %v1220 = vunpack.c.h.b16 %v526
        %v1221 = vunpack.c.l.b16 %v527
        %v1222 = vunpack.c.h.b16 %v527
        %v1223 = vunpack.c.l.b16 %v528
        %v1224 = vunpack.c.h.b16 %v528
        %v1225 = vunpack.c.l.b16 %v529
        %v1226 = vunpack.c.h.b16 %v529
        %v1227 = vunpack.c.l.b16 %v530
        %v1228 = vunpack.c.h.b16 %v530
        %v1229 = vunpack.c.l.b16 %v531
        %v1230 = vunpack.c.h.b16 %v531
        %v1231 = vunpack.c.l.b16 %v532
        %v1232 = vunpack.c.h.b16 %v532
        %v1233 = vunpack.c.l.b16 %v533
        %v1234 = vunpack.c.h.b16 %v533
        %v1235 = vunpack.c.l.b16 %v534
        %v1236 = vunpack.c.h.b16 %v534
        %v1237 = vunpack.c.l.b16 %v535
        %v1238 = vunpack.c.h.b16 %v535
        %v1239 = vunpack.c.l.b16 %v536
        %v1240 = vunpack.c.h.b16 %v536
        %v1241 = vunpack.c.l.b16 %v537
        %v1242 = vunpack.c.h.b16 %v537
        %v1243 = vunpack.c.l.b16 %v538
        %v1244 = vunpack.c.h.b16 %v538
        %v1245 = vunpack.c.l.b16 %v539
        %v1246 = vunpack.c.h.b16 %v539
        %v1247 = vunpack.c.l.b16 %v540
        %v1248 = vunpack.c.h.b16 %v540
        %v1249 = vunpack.c.l.b16 %v541
        %v1250 = vunpack.c.h.b16 %v541
        %v1251 = vunpack.c.l.b16 %v542
        %v1252 = vunpack.c.h.b16 %v542
        %v1253 = vunpack.c.l.b16 %v543
        %v1254 = vunpack.c.h.b16 %v543
        %v1255 = vunpack.c.l.b16 %v544
        %v1256 = vunpack.c.h.b16 %v544
        %v1257 = vunpack.c.l.b16 %v545
        %v1258 = vunpack.c.h.b16 %v545
        %v1259 = vunpack.c.l.b16 %v546
        %v1260 = vunpack.c.h.b16 %v546
        %v1261 = vunpack.c.l.b16 %v547
        %v1262 = vunpack.c.h.b16 %v547
        %v1263 = vunpack.c.l.b16 %v548
        %v1264 = vunpack.c.h.b16 %v548
        %v1265 = vunpack.c.l.b16 %v549
        %v1266 = vunpack.c.h.b16 %v549
        %v1267 = vunpack.c.l.b16 %v550
        %v1268 = vunpack.c.h.b16 %v550
        %v1269 = vunpack.c.l.b16 %v551
        %v1270 = vunpack.c.h.b16 %v551
        %v1271 = vunpack.c.l.b16 %v552
        %v1272 = vunpack.c.h.b16 %v552
        %v1273 = vunpack.c.l.b16 %v553
        %v1274 = vunpack.c.h.b16 %v553
        %v1275 = vunpack.c.l.b16 %v554
        %v1276 = vunpack.c.h.b16 %v554
        %v1277 = vunpack.c.l.b16 %v555
        %v1278 = vunpack.c.h.b16 %v555
        %v1279 = vunpack.c.l.b16 %v556
        %v1280 = vunpack.c.h.b16 %v556
        %v1281 = vunpack.c.l.b16 %v557
        %v1282 = vunpack.c.h.b16 %v557
        %v1283 = vunpack.c.l.b16 %v558
        %v1284 = vunpack.c.h.b16 %v558
        %v1285 = vunpack.c.l.b16 %v559
        %v1286 = vunpack.c.h.b16 %v559
        %v1287 = vunpack.c.l.b16 %v560
        %v1288 = vunpack.c.h.b16 %v560
        %v1289 = vunpack.c.l.b16 %v561
        %v1290 = vunpack.c.h.b16 %v561
        %v1291 = vunpack.c.l.b16 %v562
        %v1292 = vunpack.c.h.b16 %v562
        %v1293 = vunpack.c.l.b16 %v563
        %v1294 = vunpack.c.h.b16 %v563
        %v1295 = vunpack.c.l.b16 %v564
        %v1296 = vunpack.c.h.b16 %v564
        %v1297 = vunpack.c.l.b16 %v565
        %v1298 = vunpack.c.h.b16 %v565
        %v1299 = vunpack.c.l.b16 %v566
        %v1300 = vunpack.c.h.b16 %v566
        %v1301 = vunpack.c.l.b16 %v567
        %v1302 = vunpack.c.h.b16 %v567
        %v1303 = vunpack.c.l.b16 %v568
        %v1304 = vunpack.c.h.b16 %v568
        %v1305 = vunpack.c.l.b16 %v569
        %v1306 = vunpack.c.h.b16 %v569
        %v1307 = vunpack.c.l.b16 %v570
        %v1308 = vunpack.c.h.b16 %v570
        %v1309 = vunpack.c.l.b16 %v571
        %v1310 = vunpack.c.h.b16 %v571
        %v1311 = vunpack.c.l.b16 %v572
        %v1312 = vunpack.c.h.b16 %v572
        %v1313 = vunpack.c.l.b16 %v573
        %v1314 = vunpack.c.h.b16 %v573
        %v1315 = vunpack.c.l.b16 %v574
        %v1316 = vunpack.c.h.b16 %v574
        %v1317 = vunpack.c.l.b16 %v575
        %v1318 = vunpack.c.h.b16 %v575
        %v1319 = vunpack.c.l.b16 %v576
        %v1320 = vunpack.c.h.b16 %v576
        %v1321 = vunpack.c.l.b16 %v577
        %v1322 = vunpack.c.h.b16 %v577
        %v1323 = vunpack.c.l.b16 %v578
        %v1324 = vunpack.c.h.b16 %v578
        %v1325 = vunpack.c.l.b16 %v579
        %v1326 = vunpack.c.h.b16 %v579
        %v1327 = vunpack.c.l.b16 %v580
        %v1328 = vunpack.c.h.b16 %v580
        %v1329 = vunpack.c.l.b16 %v581
        %v1330 = vunpack.c.h.b16 %v581
        %v1331 = vunpack.c.l.b16 %v582
        %v1332 = vunpack.c.h.b16 %v582
        %v1333 = vunpack.c.l.b16 %v583
        %v1334 = vunpack.c.h.b16 %v583
        %v1335 = vunpack.c.l.b16 %v584
        %v1336 = vunpack.c.h.b16 %v584
        %v1337 = vpack.c.b16 %v863, %v857
        %v1338 = vpack.c.b16 %v864, %v858
        %v1339 = vpack.c.b16 %v865, %v859
        %v1340 = vpack.c.b16 %v866, %v860
        %v1341 = vpack.c.b16 %v867, %v861
        %v1342 = vpack.c.b16 %v868, %v862
        %v1343 = vpack.c.b16 %v875, %v869
        %v1344 = vpack.c.b16 %v876, %v870
        %v1345 = vpack.c.b16 %v877, %v871
        %v1346 = vpack.c.b16 %v878, %v872
        %v1347 = vpack.c.b16 %v879, %v873
        %v1348 = vpack.c.b16 %v880, %v874
        %v1349 = vpack.c.b16 %v887, %v881
        %v1350 = vpack.c.b16 %v888, %v882
        %v1351 = vpack.c.b16 %v889, %v883
        %v1352 = vpack.c.b16 %v890, %v884
        %v1353 = vpack.c.b16 %v891, %v885
        %v1354 = vpack.c.b16 %v892, %v886
        %v1355 = vpack.c.b16 %v899, %v893
        %v1356 = vpack.c.b16 %v900, %v894
        %v1357 = vpack.c.b16 %v901, %v895
        %v1358 = vpack.c.b16 %v902, %v896
        %v1359 = vpack.c.b16 %v903, %v897
        %v1360 = vpack.c.b16 %v904, %v898
        %v1361 = vpack.c.b16 %v911, %v905
        %v1362 = vpack.c.b16 %v912, %v906
        %v1363 = vpack.c.b16 %v913, %v907
        %v1364 = vpack.c.b16 %v914, %v908
        %v1365 = vpack.c.b16 %v915, %v909
        %v1366 = vpack.c.b16 %v916, %v910
        %v1367 = vpack.c.b16 %v923, %v917
        %v1368 = vpack.c.b16 %v924, %v918
        %v1369 = vpack.c.b16 %v925, %v919
        %v1370 = vpack.c.b16 %v926, %v920
        %v1371 = vpack.c.b16 %v927, %v921
        %v1372 = vpack.c.b16 %v928, %v922
        %v1373 = vpack.c.b16 %v935, %v929
        %v1374 = vpack.c.b16 %v936, %v930
        %v1375 = vpack.c.b16 %v937, %v931
        %v1376 = vpack.c.b16 %v938, %v932
        %v1377 = vpack.c.b16 %v939, %v933
        %v1378 = vpack.c.b16 %v940, %v934
        %v1379 = vpack.c.b16 %v947, %v941
        %v1380 = vpack.c.b16 %v948, %v942
        %v1381 = vpack.c.b16 %v949, %v943
        %v1382 = vpack.c.b16 %v950, %v944
        %v1383 = vpack.c.b16 %v951, %v945
        %v1384 = vpack.c.b16 %v952, %v946
        %v1385 = vpack.c.b16 %v959, %v953
        %v1386 = vpack.c.b16 %v960, %v954
        %v1387 = vpack.c.b16 %v961, %v955
        %v1388 = vpack.c.b16 %v962, %v956
        %v1389 = vpack.c.b16 %v963, %v957
        %v1390 = vpack.c.b16 %v964, %v958
        %v1391 = vpack.c.b16 %v971, %v965
        %v1392 = vpack.c.b16 %v972, %v966
        %v1393 = vpack.c.b16 %v973, %v967
        %v1394 = vpack.c.b16 %v974, %v968
        %v1395 = vpack.c.b16 %v975, %v969
        %v1396 = vpack.c.b16 %v976, %v970
        %v1397 = vpack.c.b16 %v983, %v977
        %v1398 = vpack.c.b16 %v984, %v978
        %v1399 = vpack.c.b16 %v985, %v979
        %v1400 = vpack.c.b16 %v986, %v980
        %v1401 = vpack.c.b16 %v987, %v981
        %v1402 = vpack.c.b16 %v988, %v982
        %v1403 = vpack.c.b16 %v995, %v989
        %v1404 = vpack.c.b16 %v996, %v990
        %v1405 = vpack.c.b16 %v997, %v991
        %v1406 = vpack.c.b16 %v998, %v992
        %v1407 = vpack.c.b16 %v999, %v993
        %v1408 = vpack.c.b16 %v1000, %v994
        %v1409 = vpack.c.b16 %v1007, %v1001
        %v1410 = vpack.c.b16 %v1008, %v1002
        %v1411 = vpack.c.b16 %v1009, %v1003
        %v1412 = vpack.c.b16 %v1010, %v1004
        %v1413 = vpack.c.b16 %v1011, %v1005
        %v1414 = vpack.c.b16 %v1012, %v1006
        %v1415 = vpack.c.b16 %v1019, %v1013
        %v1416 = vpack.c.b16 %v1020, %v1014
        %v1417 = vpack.c.b16 %v1021, %v1015
        %v1418 = vpack.c.b16 %v1022, %v1016
        %v1419 = vpack.c.b16 %v1023, %v1017
        %v1420 = vpack.c.b16 %v1024, %v1018
        %v1421 = vpack.c.b16 %v1031, %v1025
        %v1422 = vpack.c.b16 %v1032, %v1026
        %v1423 = vpack.c.b16 %v1033, %v1027
        %v1424 = vpack.c.b16 %v1034, %v1028
        %v1425 = vpack.c.b16 %v1035, %v1029
        %v1426 = vpack.c.b16 %v1036, %v1030
        %v1427 = vpack.c.b16 %v1043, %v1037
        %v1428 = vpack.c.b16 %v1044, %v1038
        %v1429 = vpack.c.b16 %v1045, %v1039
        %v1430 = vpack.c.b16 %v1046, %v1040
        %v1431 = vpack.c.b16 %v1047, %v1041
        %v1432 = vpack.c.b16 %v1048, %v1042
        %v1433 = vpack.c.b16 %v1055, %v1049
        %v1434 = vpack.c.b16 %v1056, %v1050
        %v1435 = vpack.c.b16 %v1057, %v1051
        %v1436 = vpack.c.b16 %v1058, %v1052
        %v1437 = vpack.c.b16 %v1059, %v1053
        %v1438 = vpack.c.b16 %v1060, %v1054
        %v1439 = vpack.c.b16 %v1067, %v1061
        %v1440 = vpack.c.b16 %v1068, %v1062
        %v1441 = vpack.c.b16 %v1069, %v1063
        %v1442 = vpack.c.b16 %v1070, %v1064
        %v1443 = vpack.c.b16 %v1071, %v1065
        %v1444 = vpack.c.b16 %v1072, %v1066
        %v1445 = vpack.c.b16 %v1079, %v1073
        %v1446 = vpack.c.b16 %v1080, %v1074
        %v1447 = vpack.c.b16 %v1081, %v1075
        %v1448 = vpack.c.b16 %v1082, %v1076
        %v1449 = vpack.c.b16 %v1083, %v1077
        %v1450 = vpack.c.b16 %v1084, %v1078
        %v1451 = vpack.c.b16 %v1091, %v1085
        %v1452 = vpack.c.b16 %v1092, %v1086
        %v1453 = vpack.c.b16 %v1093, %v1087
        %v1454 = vpack.c.b16 %v1094, %v1088
        %v1455 = vpack.c.b16 %v1095, %v1089
        %v1456 = vpack.c.b16 %v1096, %v1090
        %v1457 = vpack.c.b16 %v1103, %v1097
        %v1458 = vpack.c.b16 %v1104, %v1098
        %v1459 = vpack.c.b16 %v1105, %v1099
        %v1460 = vpack.c.b16 %v1106, %v1100
        %v1461 = vpack.c.b16 %v1107, %v1101
        %v1462 = vpack.c.b16 %v1108, %v1102
        %v1463 = vpack.c.b16 %v1115, %v1109
        %v1464 = vpack.c.b16 %v1116, %v1110
        %v1465 = vpack.c.b16 %v1117, %v1111
        %v1466 = vpack.c.b16 %v1118, %v1112
        %v1467 = vpack.c.b16 %v1119, %v1113
        %v1468 = vpack.c.b16 %v1120, %v1114
        %v1469 = vpack.c.b16 %v1127, %v1121
        %v1470 = vpack.c.b16 %v1128, %v1122
        %v1471 = vpack.c.b16 %v1129, %v1123
        %v1472 = vpack.c.b16 %v1130, %v1124
        %v1473 = vpack.c.b16 %v1131, %v1125
        %v1474 = vpack.c.b16 %v1132, %v1126
        %v1475 = vpack.c.b16 %v1139, %v1133
        %v1476 = vpack.c.b16 %v1140, %v1134
        %v1477 = vpack.c.b16 %v1141, %v1135
        %v1478 = vpack.c.b16 %v1142, %v1136
        %v1479 = vpack.c.b16 %v1143, %v1137
        %v1480 = vpack.c.b16 %v1144, %v1138
        %v1481 = vpack.c.b16 %v1151, %v1145
        %v1482 = vpack.c.b16 %v1152, %v1146
        %v1483 = vpack.c.b16 %v1153, %v1147
        %v1484 = vpack.c.b16 %v1154, %v1148
        %v1485 = vpack.c.b16 %v1155, %v1149
        %v1486 = vpack.c.b16 %v1156, %v1150
        %v1487 = vpack.c.b16 %v1163, %v1157
        %v1488 = vpack.c.b16 %v1164, %v1158
        %v1489 = vpack.c.b16 %v1165, %v1159
        %v1490 = vpack.c.b16 %v1166, %v1160
        %v1491 = vpack.c.b16 %v1167, %v1161
        %v1492 = vpack.c.b16 %v1168, %v1162
        %v1493 = vpack.c.b16 %v1175, %v1169
        %v1494 = vpack.c.b16 %v1176, %v1170
        %v1495 = vpack.c.b16 %v1177, %v1171
        %v1496 = vpack.c.b16 %v1178, %v1172
        %v1497 = vpack.c.b16 %v1179, %v1173
        %v1498 = vpack.c.b16 %v1180, %v1174
        %v1499 = vpack.c.b16 %v1187, %v1181
        %v1500 = vpack.c.b16 %v1188, %v1182
        %v1501 = vpack.c.b16 %v1189, %v1183
        %v1502 = vpack.c.b16 %v1190, %v1184
        %v1503 = vpack.c.b16 %v1191, %v1185
        %v1504 = vpack.c.b16 %v1192, %v1186
        %v1505 = vpack.c.b16 %v1199, %v1193
        %v1506 = vpack.c.b16 %v1200, %v1194
        %v1507 = vpack.c.b16 %v1201, %v1195
        %v1508 = vpack.c.b16 %v1202, %v1196
        %v1509 = vpack.c.b16 %v1203, %v1197
        %v1510 = vpack.c.b16 %v1204, %v1198
        %v1511 = vpack.c.b16 %v1211, %v1205
        %v1512 = vpack.c.b16 %v1212, %v1206
        %v1513 = vpack.c.b16 %v1213, %v1207
        %v1514 = vpack.c.b16 %v1214, %v1208
        %v1515 = vpack.c.b16 %v1215, %v1209
        %v1516 = vpack.c.b16 %v1216, %v1210
        %v1517 = vpack.c.b16 %v1223, %v1217
        %v1518 = vpack.c.b16 %v1224, %v1218
        %v1519 = vpack.c.b16 %v1225, %v1219
        %v1520 = vpack.c.b16 %v1226, %v1220
        %v1521 = vpack.c.b16 %v1227, %v1221
        %v1522 = vpack.c.b16 %v1228, %v1222
        %v1523 = vpack.c.b16 %v1235, %v1229
        %v1524 = vpack.c.b16 %v1236, %v1230
        %v1525 = vpack.c.b16 %v1237, %v1231
        %v1526 = vpack.c.b16 %v1238, %v1232
        %v1527 = vpack.c.b16 %v1239, %v1233
        %v1528 = vpack.c.b16 %v1240, %v1234
        %v1529 = vpack.c.b16 %v1247, %v1241
        %v1530 = vpack.c.b16 %v1248, %v1242
        %v1531 = vpack.c.b16 %v1249, %v1243
        %v1532 = vpack.c.b16 %v1250, %v1244
        %v1533 = vpack.c.b16 %v1251, %v1245
        %v1534 = vpack.c.b16 %v1252, %v1246
        %v1535 = vpack.c.b16 %v1259, %v1253
        %v1536 = vpack.c.b16 %v1260, %v1254
        %v1537 = vpack.c.b16 %v1261, %v1255
        %v1538 = vpack.c.b16 %v1262, %v1256
        %v1539 = vpack.c.b16 %v1263, %v1257
        %v1540 = vpack.c.b16 %v1264, %v1258
        %v1541 = vpack.c.b16 %v1271, %v1265
        %v1542 = vpack.c.b16 %v1272, %v1266
        %v1543 = vpack.c.b16 %v1273, %v1267
        %v1544 = vpack.c.b16 %v1274, %v1268
        %v1545 = vpack.c.b16 %v1275, %v1269
        %v1546 = vpack.c.b16 %v1276, %v1270
        %v1547 = vpack.c.b16 %v1283, %v1277
        %v1548 = vpack.c.b16 %v1284, %v1278
        %v1549 = vpack.c.b16 %v1285, %v1279
        %v1550 = vpack.c.b16 %v1286, %v1280
        %v1551 = vpack.c.b16 %v1287, %v1281
        %v1552 = vpack.c.b16 %v1288, %v1282
        %v1553 = vpack.c.b16 %v1295, %v1289
        %v1554 = vpack.c.b16 %v1296, %v1290
        %v1555 = vpack.c.b16 %v1297, %v1291
        %v1556 = vpack.c.b16 %v1298, %v1292
        %v1557 = vpack.c.b16 %v1299, %v1293
        %v1558 = vpack.c.b16 %v1300, %v1294
        %v1559 = vpack.c.b16 %v1307, %v1301
        %v1560 = vpack.c.b16 %v1308, %v1302
        %v1561 = vpack.c.b16 %v1309, %v1303
        %v1562 = vpack.c.b16 %v1310, %v1304
        %v1563 = vpack.c.b16 %v1311, %v1305
        %v1564 = vpack.c.b16 %v1312, %v1306
        %v1565 = vpack.c.b16 %v1319, %v1313
        %v1566 = vpack.c.b16 %v1320, %v1314
        %v1567 = vpack.c.b16 %v1321, %v1315
        %v1568 = vpack.c.b16 %v1322, %v1316
        %v1569 = vpack.c.b16 %v1323, %v1317
        %v1570 = vpack.c.b16 %v1324, %v1318
        %v1571 = vpack.c.b16 %v1331, %v1325
        %v1572 = vpack.c.b16 %v1332, %v1326
        %v1573 = vpack.c.b16 %v1333, %v1327
        %v1574 = vpack.c.b16 %v1334, %v1328
        %v1575 = vpack.c.b16 %v1335, %v1329
        %v1576 = vpack.c.b16 %v1336, %v1330
        %1817 = vmatprep.subr.bf16.mxu0 %v1380
        %1818 = vmatpush1.bf16.msra.mxu0 %v1379
        %1819 = vmatprep.subr.bf16.mxu0 %v1374
        %1820 = vmatpush1.bf16.msra.mxu0 %v1373
        %1821 = vmatprep.subr.bf16.mxu0 %v1368
        %1822 = vmatpush1.bf16.msra.mxu0 %v1367
        %1823 = vmatprep.subr.bf16.mxu0 %v1362
        %1824 = vmatpush1.bf16.msra.mxu0 %v1361
        %1825 = vmatprep.subr.bf16.mxu0 %v1356
        %1826 = vmatpush1.bf16.msra.mxu0 %v1355
        %1827 = vmatprep.subr.bf16.mxu0 %v1350
        %1828 = vmatpush1.bf16.msra.mxu0 %v1349
        %1829 = vmatprep.subr.bf16.mxu0 %v1344
        %1830 = vmatpush1.bf16.msra.mxu0 %v1343
        %1831 = vmatprep.subr.bf16.mxu0 %v1338
        %1832 = vmatpush1.bf16.msra.mxu0 %v1337
        %1833 = vmatprep.subr.bf16.mxu0 %v1428
        %1834 = vmatpush2.bf16.msra.mxu0 %v1427
        %1835 = vmatprep.subr.bf16.mxu0 %v1422
        %1836 = vmatpush2.bf16.msra.mxu0 %v1421
        %1837 = vmatprep.subr.bf16.mxu0 %v1416
        %1838 = vmatpush2.bf16.msra.mxu0 %v1415
        %1839 = vmatprep.subr.bf16.mxu0 %v1410
        %1840 = vmatpush2.bf16.msra.mxu0 %v1409
        %1841 = vmatprep.subr.bf16.mxu0 %v1404
        %1842 = vmatpush2.bf16.msra.mxu0 %v1403
        %1843 = vmatprep.subr.bf16.mxu0 %v1398
        %1844 = vmatpush2.bf16.msra.mxu0 %v1397
        %1845 = vmatprep.subr.bf16.mxu0 %v1392
        %1846 = vmatpush2.bf16.msra.mxu0 %v1391
        %1847 = vmatprep.subr.bf16.mxu0 %v1386
        %1848 = vmatpush2.bf16.msra.mxu0 %v1385
        %1849 = vmatprep.mubr.bf16.mxu0 %v291
        %1850 = vmatmul.mubr.bf16.gmra.mxu0 %v269
        %v1851 = vpop.f32.mrf.mxu0
        %v1852 = vadd.f32 %v590, %v1851
        %v1853 = vpop.f32.mrf.mxu0
        %v1854 = vadd.f32 %v594, %v1853
        %v1855 = vpop.f32.mrf.mxu0
        %v1856 = vadd.f32 %v590, %v1855
        %v1857 = vpop.f32.mrf.mxu0
        %v1858 = vadd.f32 %v594, %v1857
        %1859 = vmatprep.mubr.bf16.mxu0 %v303
        %1860 = vmatmul.mubr.bf16.gmra.mxu0 %v270
        %v1861 = vpop.f32.mrf.mxu0
        %v1862 = vadd.f32 %v590, %v1861
        %v1863 = vpop.f32.mrf.mxu0
        %v1864 = vadd.f32 %v594, %v1863
        %v1865 = vpop.f32.mrf.mxu0
        %v1866 = vadd.f32 %v590, %v1865
        %v1867 = vpop.f32.mrf.mxu0
        %v1868 = vadd.f32 %v594, %v1867
        %1869 = vdwg.mxu0
        %1870 = vmatprep.subr.bf16.mxu0 %v1476
        %1871 = vmatpush1.bf16.msra.mxu0 %v1475
        %1872 = vmatprep.subr.bf16.mxu0 %v1470
        %1873 = vmatpush1.bf16.msra.mxu0 %v1469
        %1874 = vmatprep.subr.bf16.mxu0 %v1464
        %1875 = vmatpush1.bf16.msra.mxu0 %v1463
        %1876 = vmatprep.subr.bf16.mxu0 %v1458
        %1877 = vmatpush1.bf16.msra.mxu0 %v1457
        %1878 = vmatprep.subr.bf16.mxu0 %v1452
        %1879 = vmatpush1.bf16.msra.mxu0 %v1451
        %1880 = vmatprep.subr.bf16.mxu0 %v1446
        %1881 = vmatpush1.bf16.msra.mxu0 %v1445
        %1882 = vmatprep.subr.bf16.mxu0 %v1440
        %1883 = vmatpush1.bf16.msra.mxu0 %v1439
        %1884 = vmatprep.subr.bf16.mxu0 %v1434
        %1885 = vmatpush1.bf16.msra.mxu0 %v1433
        %1886 = vmatprep.subr.bf16.mxu0 %v1524
        %1887 = vmatpush2.bf16.msra.mxu0 %v1523
        %1888 = vmatprep.subr.bf16.mxu0 %v1518
        %1889 = vmatpush2.bf16.msra.mxu0 %v1517
        %1890 = vmatprep.subr.bf16.mxu0 %v1512
        %1891 = vmatpush2.bf16.msra.mxu0 %v1511
        %1892 = vmatprep.subr.bf16.mxu0 %v1506
        %1893 = vmatpush2.bf16.msra.mxu0 %v1505
        %1894 = vmatprep.subr.bf16.mxu0 %v1500
        %1895 = vmatpush2.bf16.msra.mxu0 %v1499
        %1896 = vmatprep.subr.bf16.mxu0 %v1494
        %1897 = vmatpush2.bf16.msra.mxu0 %v1493
        %1898 = vmatprep.subr.bf16.mxu0 %v1488
        %1899 = vmatpush2.bf16.msra.mxu0 %v1487
        %1900 = vmatprep.subr.bf16.mxu0 %v1482
        %1901 = vmatpush2.bf16.msra.mxu0 %v1481
        %1902 = vmatprep.mubr.bf16.mxu0 %v324
        %1903 = vmatmul.mubr.bf16.gmra.mxu0 %v309
        %v1904 = vpop.f32.mrf.mxu0
        %v1905 = vadd.f32 %v1852, %v1904
        %v1906 = vpop.f32.mrf.mxu0
        %v1907 = vadd.f32 %v1854, %v1906
        %v1908 = vpop.f32.mrf.mxu0
        %v1909 = vadd.f32 %v1856, %v1908
        %v1910 = vpop.f32.mrf.mxu0
        %v1911 = vadd.f32 %v1858, %v1910
        %1912 = vmatprep.mubr.bf16.mxu0 %v333
        %1913 = vmatmul.mubr.bf16.gmra.mxu0 %v312
        %v1914 = vpop.f32.mrf.mxu0
        %v1915 = vadd.f32 %v1862, %v1914
        %v1916 = vpop.f32.mrf.mxu0
        %v1917 = vadd.f32 %v1864, %v1916
        %v1918 = vpop.f32.mrf.mxu0
        %v1919 = vadd.f32 %v1866, %v1918
        %v1920 = vpop.f32.mrf.mxu0
        %v1921 = vadd.f32 %v1868, %v1920
        %1922 = vdwg.mxu0
        %1923 = vmatprep.subr.bf16.mxu0 %v1572
        %1924 = vmatpush1.bf16.msra.mxu0 %v1571
        %1925 = vmatprep.subr.bf16.mxu0 %v1566
        %1926 = vmatpush1.bf16.msra.mxu0 %v1565
        %1927 = vmatprep.subr.bf16.mxu0 %v1560
        %1928 = vmatpush1.bf16.msra.mxu0 %v1559
        %1929 = vmatprep.subr.bf16.mxu0 %v1554
        %1930 = vmatpush1.bf16.msra.mxu0 %v1553
        %1931 = vmatprep.subr.bf16.mxu0 %v1548
        %1932 = vmatpush1.bf16.msra.mxu0 %v1547
        %1933 = vmatprep.subr.bf16.mxu0 %v1542
        %1934 = vmatpush1.bf16.msra.mxu0 %v1541
        %1935 = vmatprep.subr.bf16.mxu0 %v1536
        %1936 = vmatpush1.bf16.msra.mxu0 %v1535
        %1937 = vmatprep.subr.bf16.mxu0 %v1530
        %1938 = vmatpush1.bf16.msra.mxu0 %v1529
        %1939 = vmatprep.subr.bf16.mxu0 0
        %1940 = vmatpush2.bf16.msra.mxu0 0
        %1941 = vmatprep.subr.bf16.mxu0 0
        %1942 = vmatpush2.bf16.msra.mxu0 0
        %1943 = vmatprep.subr.bf16.mxu0 0
        %1944 = vmatpush2.bf16.msra.mxu0 0
        %1945 = vmatprep.subr.bf16.mxu0 0
        %1946 = vmatpush2.bf16.msra.mxu0 0
        %1947 = vmatprep.subr.bf16.mxu0 0
        %1948 = vmatpush2.bf16.msra.mxu0 0
        %1949 = vmatprep.subr.bf16.mxu0 0
        %1950 = vmatpush2.bf16.msra.mxu0 0
        %1951 = vmatprep.subr.bf16.mxu0 0
        %1952 = vmatpush2.bf16.msra.mxu0 0
        %1953 = vmatprep.subr.bf16.mxu0 0
        %1954 = vmatpush2.bf16.msra.mxu0 0
        %1955 = vmatprep.mubr.bf16.mxu0 0
        %1956 = vmatmul.mubr.bf16.gmra.mxu0 %v339
        %v1957 = vpop.f32.mrf.mxu0
        %v1958 = vadd.f32 %v1905, %v1957
        %v1959 = vpop.f32.mrf.mxu0
        %v1960 = vadd.f32 %v1907, %v1959
        %v1961 = vpop.f32.mrf.mxu0
        %v1962 = vadd.f32 %v1909, %v1961
        %v1963 = vpop.f32.mrf.mxu0
        %v1964 = vadd.f32 %v1911, %v1963
        %1965 = vmatprep.mubr.bf16.mxu0 0
        %1966 = vmatmul.mubr.bf16.gmra.mxu0 %v342
        %v1967 = vpop.f32.mrf.mxu0
        %v1968 = vadd.f32 %v1915, %v1967
        %v1969 = vpop.f32.mrf.mxu0
        %v1970 = vadd.f32 %v1917, %v1969
        %v1971 = vpop.f32.mrf.mxu0
        %v1972 = vadd.f32 %v1919, %v1971
        %v1973 = vpop.f32.mrf.mxu0
        %v1974 = vadd.f32 %v1921, %v1973
        %1975 = vdwg.mxu0
        %1976 = vmatprep.subr.bf16.mxu0 %v1382
        %1977 = vmatpush1.bf16.msra.mxu0 %v1381
        %1978 = vmatprep.subr.bf16.mxu0 %v1376
        %1979 = vmatpush1.bf16.msra.mxu0 %v1375
        %1980 = vmatprep.subr.bf16.mxu0 %v1370
        %1981 = vmatpush1.bf16.msra.mxu0 %v1369
        %1982 = vmatprep.subr.bf16.mxu0 %v1364
        %1983 = vmatpush1.bf16.msra.mxu0 %v1363
        %1984 = vmatprep.subr.bf16.mxu0 %v1358
        %1985 = vmatpush1.bf16.msra.mxu0 %v1357
        %1986 = vmatprep.subr.bf16.mxu0 %v1352
        %1987 = vmatpush1.bf16.msra.mxu0 %v1351
        %1988 = vmatprep.subr.bf16.mxu0 %v1346
        %1989 = vmatpush1.bf16.msra.mxu0 %v1345
        %1990 = vmatprep.subr.bf16.mxu0 %v1340
        %1991 = vmatpush1.bf16.msra.mxu0 %v1339
        %1992 = vmatprep.subr.bf16.mxu0 %v1430
        %1993 = vmatpush2.bf16.msra.mxu0 %v1429
        %1994 = vmatprep.subr.bf16.mxu0 %v1424
        %1995 = vmatpush2.bf16.msra.mxu0 %v1423
        %1996 = vmatprep.subr.bf16.mxu0 %v1418
        %1997 = vmatpush2.bf16.msra.mxu0 %v1417
        %1998 = vmatprep.subr.bf16.mxu0 %v1412
        %1999 = vmatpush2.bf16.msra.mxu0 %v1411
        %2000 = vmatprep.subr.bf16.mxu0 %v1406
        %2001 = vmatpush2.bf16.msra.mxu0 %v1405
        %2002 = vmatprep.subr.bf16.mxu0 %v1400
        %2003 = vmatpush2.bf16.msra.mxu0 %v1399
        %2004 = vmatprep.subr.bf16.mxu0 %v1394
        %2005 = vmatpush2.bf16.msra.mxu0 %v1393
        %2006 = vmatprep.subr.bf16.mxu0 %v1388
        %2007 = vmatpush2.bf16.msra.mxu0 %v1387
        %2008 = vmatprep.mubr.bf16.mxu0 %v291
        %2009 = vmatmul.mubr.bf16.gmra.mxu0 %v269
        %v2010 = vpop.f32.mrf.mxu0
        %v2011 = vadd.f32 %v598, %v2010
        %v2012 = vpop.f32.mrf.mxu0
        %v2013 = vadd.f32 %v602, %v2012
        %v2014 = vpop.f32.mrf.mxu0
        %v2015 = vadd.f32 %v598, %v2014
        %v2016 = vpop.f32.mrf.mxu0
        %v2017 = vadd.f32 %v602, %v2016
        %2018 = vmatprep.mubr.bf16.mxu0 %v303
        %2019 = vmatmul.mubr.bf16.gmra.mxu0 %v270
        %v2020 = vpop.f32.mrf.mxu0
        %v2021 = vadd.f32 %v598, %v2020
        %v2022 = vpop.f32.mrf.mxu0
        %v2023 = vadd.f32 %v602, %v2022
        %v2024 = vpop.f32.mrf.mxu0
        %v2025 = vadd.f32 %v598, %v2024
        %v2026 = vpop.f32.mrf.mxu0
        %v2027 = vadd.f32 %v602, %v2026
        %2028 = vdwg.mxu0
        %2029 = vmatprep.subr.bf16.mxu0 %v1478
        %2030 = vmatpush1.bf16.msra.mxu0 %v1477
        %2031 = vmatprep.subr.bf16.mxu0 %v1472
        %2032 = vmatpush1.bf16.msra.mxu0 %v1471
        %2033 = vmatprep.subr.bf16.mxu0 %v1466
        %2034 = vmatpush1.bf16.msra.mxu0 %v1465
        %2035 = vmatprep.subr.bf16.mxu0 %v1460
        %2036 = vmatpush1.bf16.msra.mxu0 %v1459
        %2037 = vmatprep.subr.bf16.mxu0 %v1454
        %2038 = vmatpush1.bf16.msra.mxu0 %v1453
        %2039 = vmatprep.subr.bf16.mxu0 %v1448
        %2040 = vmatpush1.bf16.msra.mxu0 %v1447
        %2041 = vmatprep.subr.bf16.mxu0 %v1442
        %2042 = vmatpush1.bf16.msra.mxu0 %v1441
        %2043 = vmatprep.subr.bf16.mxu0 %v1436
        %2044 = vmatpush1.bf16.msra.mxu0 %v1435
        %2045 = vmatprep.subr.bf16.mxu0 %v1526
        %2046 = vmatpush2.bf16.msra.mxu0 %v1525
        %2047 = vmatprep.subr.bf16.mxu0 %v1520
        %2048 = vmatpush2.bf16.msra.mxu0 %v1519
        %2049 = vmatprep.subr.bf16.mxu0 %v1514
        %2050 = vmatpush2.bf16.msra.mxu0 %v1513
        %2051 = vmatprep.subr.bf16.mxu0 %v1508
        %2052 = vmatpush2.bf16.msra.mxu0 %v1507
        %2053 = vmatprep.subr.bf16.mxu0 %v1502
        %2054 = vmatpush2.bf16.msra.mxu0 %v1501
        %2055 = vmatprep.subr.bf16.mxu0 %v1496
        %2056 = vmatpush2.bf16.msra.mxu0 %v1495
        %2057 = vmatprep.subr.bf16.mxu0 %v1490
        %2058 = vmatpush2.bf16.msra.mxu0 %v1489
        %2059 = vmatprep.subr.bf16.mxu0 %v1484
        %2060 = vmatpush2.bf16.msra.mxu0 %v1483
        %2061 = vmatprep.mubr.bf16.mxu0 %v324
        %2062 = vmatmul.mubr.bf16.gmra.mxu0 %v309
        %v2063 = vpop.f32.mrf.mxu0
        %v2064 = vadd.f32 %v2011, %v2063
        %v2065 = vpop.f32.mrf.mxu0
        %v2066 = vadd.f32 %v2013, %v2065
        %v2067 = vpop.f32.mrf.mxu0
        %v2068 = vadd.f32 %v2015, %v2067
        %v2069 = vpop.f32.mrf.mxu0
        %v2070 = vadd.f32 %v2017, %v2069
        %2071 = vmatprep.mubr.bf16.mxu0 %v333
        %2072 = vmatmul.mubr.bf16.gmra.mxu0 %v312
        %v2073 = vpop.f32.mrf.mxu0
        %v2074 = vadd.f32 %v2021, %v2073
        %v2075 = vpop.f32.mrf.mxu0
        %v2076 = vadd.f32 %v2023, %v2075
        %v2077 = vpop.f32.mrf.mxu0
        %v2078 = vadd.f32 %v2025, %v2077
        %v2079 = vpop.f32.mrf.mxu0
        %v2080 = vadd.f32 %v2027, %v2079
        %2081 = vdwg.mxu0
        %2082 = vmatprep.subr.bf16.mxu0 %v1574
        %2083 = vmatpush1.bf16.msra.mxu0 %v1573
        %2084 = vmatprep.subr.bf16.mxu0 %v1568
        %2085 = vmatpush1.bf16.msra.mxu0 %v1567
        %2086 = vmatprep.subr.bf16.mxu0 %v1562
        %2087 = vmatpush1.bf16.msra.mxu0 %v1561
        %2088 = vmatprep.subr.bf16.mxu0 %v1556
        %2089 = vmatpush1.bf16.msra.mxu0 %v1555
        %2090 = vmatprep.subr.bf16.mxu0 %v1550
        %2091 = vmatpush1.bf16.msra.mxu0 %v1549
        %2092 = vmatprep.subr.bf16.mxu0 %v1544
        %2093 = vmatpush1.bf16.msra.mxu0 %v1543
        %2094 = vmatprep.subr.bf16.mxu0 %v1538
        %2095 = vmatpush1.bf16.msra.mxu0 %v1537
        %2096 = vmatprep.subr.bf16.mxu0 %v1532
        %2097 = vmatpush1.bf16.msra.mxu0 %v1531
        %2098 = vmatprep.subr.bf16.mxu0 0
        %2099 = vmatpush2.bf16.msra.mxu0 0
        %2100 = vmatprep.subr.bf16.mxu0 0
        %2101 = vmatpush2.bf16.msra.mxu0 0
        %2102 = vmatprep.subr.bf16.mxu0 0
        %2103 = vmatpush2.bf16.msra.mxu0 0
        %2104 = vmatprep.subr.bf16.mxu0 0
        %2105 = vmatpush2.bf16.msra.mxu0 0
        %2106 = vmatprep.subr.bf16.mxu0 0
        %2107 = vmatpush2.bf16.msra.mxu0 0
        %2108 = vmatprep.subr.bf16.mxu0 0
        %2109 = vmatpush2.bf16.msra.mxu0 0
        %2110 = vmatprep.subr.bf16.mxu0 0
        %2111 = vmatpush2.bf16.msra.mxu0 0
        %2112 = vmatprep.subr.bf16.mxu0 0
        %2113 = vmatpush2.bf16.msra.mxu0 0
        %2114 = vmatprep.mubr.bf16.mxu0 0
        %2115 = vmatmul.mubr.bf16.gmra.mxu0 %v339
        %v2116 = vpop.f32.mrf.mxu0
        %v2117 = vadd.f32 %v2064, %v2116
        %v2118 = vpop.f32.mrf.mxu0
        %v2119 = vadd.f32 %v2066, %v2118
        %v2120 = vpop.f32.mrf.mxu0
        %v2121 = vadd.f32 %v2068, %v2120
        %v2122 = vpop.f32.mrf.mxu0
        %v2123 = vadd.f32 %v2070, %v2122
        %2124 = vmatprep.mubr.bf16.mxu0 0
        %2125 = vmatmul.mubr.bf16.gmra.mxu0 %v342
        %v2126 = vpop.f32.mrf.mxu0
        %v2127 = vadd.f32 %v2074, %v2126
        %v2128 = vpop.f32.mrf.mxu0
        %v2129 = vadd.f32 %v2076, %v2128
        %v2130 = vpop.f32.mrf.mxu0
        %v2131 = vadd.f32 %v2078, %v2130
        %v2132 = vpop.f32.mrf.mxu0
        %v2133 = vadd.f32 %v2080, %v2132
        %2134 = vdwg.mxu0
        %2135 = vmatprep.subr.bf16.mxu0 %v1384
        %2136 = vmatpush1.bf16.msra.mxu0 %v1383
        %2137 = vmatprep.subr.bf16.mxu0 %v1378
        %2138 = vmatpush1.bf16.msra.mxu0 %v1377
        %2139 = vmatprep.subr.bf16.mxu0 %v1372
        %2140 = vmatpush1.bf16.msra.mxu0 %v1371
        %2141 = vmatprep.subr.bf16.mxu0 %v1366
        %2142 = vmatpush1.bf16.msra.mxu0 %v1365
        %2143 = vmatprep.subr.bf16.mxu0 %v1360
        %2144 = vmatpush1.bf16.msra.mxu0 %v1359
        %2145 = vmatprep.subr.bf16.mxu0 %v1354
        %2146 = vmatpush1.bf16.msra.mxu0 %v1353
        %2147 = vmatprep.subr.bf16.mxu0 %v1348
        %2148 = vmatpush1.bf16.msra.mxu0 %v1347
        %2149 = vmatprep.subr.bf16.mxu0 %v1342
        %2150 = vmatpush1.bf16.msra.mxu0 %v1341
        %2151 = vmatprep.subr.bf16.mxu0 %v1432
        %2152 = vmatpush2.bf16.msra.mxu0 %v1431
        %2153 = vmatprep.subr.bf16.mxu0 %v1426
        %2154 = vmatpush2.bf16.msra.mxu0 %v1425
        %2155 = vmatprep.subr.bf16.mxu0 %v1420
        %2156 = vmatpush2.bf16.msra.mxu0 %v1419
        %2157 = vmatprep.subr.bf16.mxu0 %v1414
        %2158 = vmatpush2.bf16.msra.mxu0 %v1413
        %2159 = vmatprep.subr.bf16.mxu0 %v1408
        %2160 = vmatpush2.bf16.msra.mxu0 %v1407
        %2161 = vmatprep.subr.bf16.mxu0 %v1402
        %2162 = vmatpush2.bf16.msra.mxu0 %v1401
        %2163 = vmatprep.subr.bf16.mxu0 %v1396
        %2164 = vmatpush2.bf16.msra.mxu0 %v1395
        %2165 = vmatprep.subr.bf16.mxu0 %v1390
        %2166 = vmatpush2.bf16.msra.mxu0 %v1389
        %2167 = vmatprep.mubr.bf16.mxu0 %v291
        %2168 = vmatmul.mubr.bf16.gmra.mxu0 %v269
        %v2169 = vpop.f32.mrf.mxu0
        %v2170 = vadd.f32 %v606, %v2169
        %v2171 = vpop.f32.mrf.mxu0
        %v2172 = vadd.f32 %v610, %v2171
        %v2173 = vpop.f32.mrf.mxu0
        %v2174 = vadd.f32 %v606, %v2173
        %v2175 = vpop.f32.mrf.mxu0
        %v2176 = vadd.f32 %v610, %v2175
        %2177 = vmatprep.mubr.bf16.mxu0 %v303
        %2178 = vmatmul.mubr.bf16.gmra.mxu0 %v270
        %v2179 = vpop.f32.mrf.mxu0
        %v2180 = vadd.f32 %v606, %v2179
        %v2181 = vpop.f32.mrf.mxu0
        %v2182 = vadd.f32 %v610, %v2181
        %v2183 = vpop.f32.mrf.mxu0
        %v2184 = vadd.f32 %v606, %v2183
        %v2185 = vpop.f32.mrf.mxu0
        %v2186 = vadd.f32 %v610, %v2185
        %2187 = vdwg.mxu0
        %2188 = vmatprep.subr.bf16.mxu0 %v1480
        %2189 = vmatpush1.bf16.msra.mxu0 %v1479
        %2190 = vmatprep.subr.bf16.mxu0 %v1474
        %2191 = vmatpush1.bf16.msra.mxu0 %v1473
        %2192 = vmatprep.subr.bf16.mxu0 %v1468
        %2193 = vmatpush1.bf16.msra.mxu0 %v1467
        %2194 = vmatprep.subr.bf16.mxu0 %v1462
        %2195 = vmatpush1.bf16.msra.mxu0 %v1461
        %2196 = vmatprep.subr.bf16.mxu0 %v1456
        %2197 = vmatpush1.bf16.msra.mxu0 %v1455
        %2198 = vmatprep.subr.bf16.mxu0 %v1450
        %2199 = vmatpush1.bf16.msra.mxu0 %v1449
        %2200 = vmatprep.subr.bf16.mxu0 %v1444
        %2201 = vmatpush1.bf16.msra.mxu0 %v1443
        %2202 = vmatprep.subr.bf16.mxu0 %v1438
        %2203 = vmatpush1.bf16.msra.mxu0 %v1437
        %2204 = vmatprep.subr.bf16.mxu0 %v1528
        %2205 = vmatpush2.bf16.msra.mxu0 %v1527
        %2206 = vmatprep.subr.bf16.mxu0 %v1522
        %2207 = vmatpush2.bf16.msra.mxu0 %v1521
        %2208 = vmatprep.subr.bf16.mxu0 %v1516
        %2209 = vmatpush2.bf16.msra.mxu0 %v1515
        %2210 = vmatprep.subr.bf16.mxu0 %v1510
        %2211 = vmatpush2.bf16.msra.mxu0 %v1509
        %2212 = vmatprep.subr.bf16.mxu0 %v1504
        %2213 = vmatpush2.bf16.msra.mxu0 %v1503
        %2214 = vmatprep.subr.bf16.mxu0 %v1498
        %2215 = vmatpush2.bf16.msra.mxu0 %v1497
        %2216 = vmatprep.subr.bf16.mxu0 %v1492
        %2217 = vmatpush2.bf16.msra.mxu0 %v1491
        %2218 = vmatprep.subr.bf16.mxu0 %v1486
        %2219 = vmatpush2.bf16.msra.mxu0 %v1485
        %2220 = vmatprep.mubr.bf16.mxu0 %v324
        %2221 = vmatmul.mubr.bf16.gmra.mxu0 %v309
        %v2222 = vpop.f32.mrf.mxu0
        %v2223 = vadd.f32 %v2170, %v2222
        %v2224 = vpop.f32.mrf.mxu0
        %v2225 = vadd.f32 %v2172, %v2224
        %v2226 = vpop.f32.mrf.mxu0
        %v2227 = vadd.f32 %v2174, %v2226
        %v2228 = vpop.f32.mrf.mxu0
        %v2229 = vadd.f32 %v2176, %v2228
        %2230 = vmatprep.mubr.bf16.mxu0 %v333
        %2231 = vmatmul.mubr.bf16.gmra.mxu0 %v312
        %v2232 = vpop.f32.mrf.mxu0
        %v2233 = vadd.f32 %v2180, %v2232
        %v2234 = vpop.f32.mrf.mxu0
        %v2235 = vadd.f32 %v2182, %v2234
        %v2236 = vpop.f32.mrf.mxu0
        %v2237 = vadd.f32 %v2184, %v2236
        %v2238 = vpop.f32.mrf.mxu0
        %v2239 = vadd.f32 %v2186, %v2238
        %2240 = vdwg.mxu0
        %2241 = vmatprep.subr.bf16.mxu0 %v1576
        %2242 = vmatpush1.bf16.msra.mxu0 %v1575
        %2243 = vmatprep.subr.bf16.mxu0 %v1570
        %2244 = vmatpush1.bf16.msra.mxu0 %v1569
        %2245 = vmatprep.subr.bf16.mxu0 %v1564
        %2246 = vmatpush1.bf16.msra.mxu0 %v1563
        %2247 = vmatprep.subr.bf16.mxu0 %v1558
        %2248 = vmatpush1.bf16.msra.mxu0 %v1557
        %2249 = vmatprep.subr.bf16.mxu0 %v1552
        %2250 = vmatpush1.bf16.msra.mxu0 %v1551
        %2251 = vmatprep.subr.bf16.mxu0 %v1546
        %2252 = vmatpush1.bf16.msra.mxu0 %v1545
        %2253 = vmatprep.subr.bf16.mxu0 %v1540
        %2254 = vmatpush1.bf16.msra.mxu0 %v1539
        %2255 = vmatprep.subr.bf16.mxu0 %v1534
        %2256 = vmatpush1.bf16.msra.mxu0 %v1533
        %2257 = vmatprep.subr.bf16.mxu0 0
        %2258 = vmatpush2.bf16.msra.mxu0 0
        %2259 = vmatprep.subr.bf16.mxu0 0
        %2260 = vmatpush2.bf16.msra.mxu0 0
        %2261 = vmatprep.subr.bf16.mxu0 0
        %2262 = vmatpush2.bf16.msra.mxu0 0
        %2263 = vmatprep.subr.bf16.mxu0 0
        %2264 = vmatpush2.bf16.msra.mxu0 0
        %2265 = vmatprep.subr.bf16.mxu0 0
        %2266 = vmatpush2.bf16.msra.mxu0 0
        %2267 = vmatprep.subr.bf16.mxu0 0
        %2268 = vmatpush2.bf16.msra.mxu0 0
        %2269 = vmatprep.subr.bf16.mxu0 0
        %2270 = vmatpush2.bf16.msra.mxu0 0
        %2271 = vmatprep.subr.bf16.mxu0 0
        %2272 = vmatpush2.bf16.msra.mxu0 0
        %2273 = vmatprep.mubr.bf16.mxu0 0
        %2274 = vmatmul.mubr.bf16.gmra.mxu0 %v339
        %v2275 = vpop.f32.mrf.mxu0
        %v2276 = vadd.f32 %v2223, %v2275
        %v2277 = vpop.f32.mrf.mxu0
        %v2278 = vadd.f32 %v2225, %v2277
        %v2279 = vpop.f32.mrf.mxu0
        %v2280 = vadd.f32 %v2227, %v2279
        %v2281 = vpop.f32.mrf.mxu0
        %v2282 = vadd.f32 %v2229, %v2281
        %2283 = vmatprep.mubr.bf16.mxu0 0
        %2284 = vmatmul.mubr.bf16.gmra.mxu0 %v342
        %v2285 = vpop.f32.mrf.mxu0
        %v2286 = vadd.f32 %v2233, %v2285
        %v2287 = vpop.f32.mrf.mxu0
        %v2288 = vadd.f32 %v2235, %v2287
        %v2289 = vpop.f32.mrf.mxu0
        %v2290 = vadd.f32 %v2237, %v2289
        %v2291 = vpop.f32.mrf.mxu0
        %v2292 = vadd.f32 %v2239, %v2291
        %2293 = vdwg.mxu0
        %v2294 = vmax.f32 %v1958, 0.0
        %v2295 = vmax.f32 %v1960, 0.0
        %v2296 = vmax.f32 %v2117, 0.0
        %v2297 = vmax.f32 %v2119, 0.0
        %v2298 = vmax.f32 %v2276, 0.0
        %v2299 = vmax.f32 %v2278, 0.0
        %v2300 = vmax.f32 %v1962, 0.0
        %v2301 = vmax.f32 %v1964, 0.0
        %v2302 = vmax.f32 %v2121, 0.0
        %v2303 = vmax.f32 %v2123, 0.0
        %v2304 = vmax.f32 %v2280, 0.0
        %v2305 = vmax.f32 %v2282, 0.0
        %v2306 = vmax.f32 %v1968, 0.0
        %v2307 = vmax.f32 %v1970, 0.0
        %v2308 = vmax.f32 %v2127, 0.0
        %v2309 = vmax.f32 %v2129, 0.0
        %v2310 = vmax.f32 %v2286, 0.0
        %v2311 = vmax.f32 %v2288, 0.0
        %v2312 = vmax.f32 %v1972, 0.0
        %v2313 = vmax.f32 %v1974, 0.0
        %v2314 = vmax.f32 %v2131, 0.0
        %v2315 = vmax.f32 %v2133, 0.0
        %v2316 = vmax.f32 %v2290, 0.0
        %v2317 = vmax.f32 %v2292, 0.0
        %v2318 = vlaneseq
        %v2319 = vshrl.u32 %v2318, 7
        %v2320 = vadd.s32 %v2319, 8
        %s2321 = ssub.s32 14, %s17
        %v2322 = vstv %s2321
        %vm2323 = vcmp.lt.s32.totalorder %v2319, %v2322
        %vm2324 = vcmp.lt.s32.totalorder %v2320, %v2322
        %v2325 = vsel %vm2323, %v2294, 0.0
        %v2326 = vsel %vm2323, %v2295, 0.0
        %v2327 = vsel %vm2323, %v2296, 0.0
        %v2328 = vsel %vm2323, %v2297, 0.0
        %v2329 = vsel %vm2323, %v2298, 0.0
        %v2330 = vsel %vm2323, %v2299, 0.0
        %v2331 = vsel %vm2324, %v2300, 0.0
        %v2332 = vsel %vm2324, %v2301, 0.0
        %v2333 = vsel %vm2324, %v2302, 0.0
        %v2334 = vsel %vm2324, %v2303, 0.0
        %v2335 = vsel %vm2324, %v2304, 0.0
        %v2336 = vsel %vm2324, %v2305, 0.0
        %v2337 = vsel %vm2323, %v2306, 0.0
        %v2338 = vsel %vm2323, %v2307, 0.0
        %v2339 = vsel %vm2323, %v2308, 0.0
        %v2340 = vsel %vm2323, %v2309, 0.0
        %v2341 = vsel %vm2323, %v2310, 0.0
        %v2342 = vsel %vm2323, %v2311, 0.0
        %v2343 = vsel %vm2324, %v2312, 0.0
        %v2344 = vsel %vm2324, %v2313, 0.0
        %v2345 = vsel %vm2324, %v2314, 0.0
        %v2346 = vsel %vm2324, %v2315, 0.0
        %v2347 = vsel %vm2324, %v2316, 0.0
        %v2348 = vsel %vm2324, %v2317, 0.0
        %v2349 = vmax.f32 %v2325, %v2331
        %v2350 = vrot.slane %v2349, 4
        %v2351 = vmax.f32 %v2349, %v2350
        %v2352 = vrot.slane %v2351, 2
        %v2353 = vmax.f32 %v2351, %v2352
        %v2354 = vrot.slane %v2353, 1
        %v2355 = vmax.f32 %v2353, %v2354
        %v2356 = vmax.f32 %v2326, %v2332
        %v2357 = vrot.slane %v2356, 4
        %v2358 = vmax.f32 %v2356, %v2357
        %v2359 = vrot.slane %v2358, 2
        %v2360 = vmax.f32 %v2358, %v2359
        %v2361 = vrot.slane %v2360, 1
        %v2362 = vmax.f32 %v2360, %v2361
        %v2363 = vmax.f32 %v2327, %v2333
        %v2364 = vrot.slane %v2363, 4
        %v2365 = vmax.f32 %v2363, %v2364
        %v2366 = vrot.slane %v2365, 2
        %v2367 = vmax.f32 %v2365, %v2366
        %v2368 = vrot.slane %v2367, 1
        %v2369 = vmax.f32 %v2367, %v2368
        %v2370 = vmax.f32 %v2328, %v2334
        %v2371 = vrot.slane %v2370, 4
        %v2372 = vmax.f32 %v2370, %v2371
        %v2373 = vrot.slane %v2372, 2
        %v2374 = vmax.f32 %v2372, %v2373
        %v2375 = vrot.slane %v2374, 1
        %v2376 = vmax.f32 %v2374, %v2375
        %v2377 = vmax.f32 %v2329, %v2335
        %v2378 = vrot.slane %v2377, 4
        %v2379 = vmax.f32 %v2377, %v2378
        %v2380 = vrot.slane %v2379, 2
        %v2381 = vmax.f32 %v2379, %v2380
        %v2382 = vrot.slane %v2381, 1
        %v2383 = vmax.f32 %v2381, %v2382
        %vm2384 = vcmask 490496
        %v2385 = vsel %vm2384, %v2330, -inf
        %v2386 = vsel %vm2384, %v2336, -inf
        %v2387 = vmax.f32 %v2385, %v2386
        %v2388 = vrot.slane %v2387, 4
        %v2389 = vmax.f32 %v2387, %v2388
        %v2390 = vrot.slane %v2389, 2
        %v2391 = vmax.f32 %v2389, %v2390
        %v2392 = vrot.slane %v2391, 1
        %v2393 = vmax.f32 %v2391, %v2392
        %v2394 = vmax.f32 %v2337, %v2343
        %v2395 = vrot.slane %v2394, 4
        %v2396 = vmax.f32 %v2394, %v2395
        %v2397 = vrot.slane %v2396, 2
        %v2398 = vmax.f32 %v2396, %v2397
        %v2399 = vrot.slane %v2398, 1
        %v2400 = vmax.f32 %v2398, %v2399
        %v2401 = vmax.f32 %v2338, %v2344
        %v2402 = vrot.slane %v2401, 4
        %v2403 = vmax.f32 %v2401, %v2402
        %v2404 = vrot.slane %v2403, 2
        %v2405 = vmax.f32 %v2403, %v2404
        %v2406 = vrot.slane %v2405, 1
        %v2407 = vmax.f32 %v2405, %v2406
        %v2408 = vmax.f32 %v2339, %v2345
        %v2409 = vrot.slane %v2408, 4
        %v2410 = vmax.f32 %v2408, %v2409
        %v2411 = vrot.slane %v2410, 2
        %v2412 = vmax.f32 %v2410, %v2411
        %v2413 = vrot.slane %v2412, 1
        %v2414 = vmax.f32 %v2412, %v2413
        %v2415 = vmax.f32 %v2340, %v2346
        %v2416 = vrot.slane %v2415, 4
        %v2417 = vmax.f32 %v2415, %v2416
        %v2418 = vrot.slane %v2417, 2
        %v2419 = vmax.f32 %v2417, %v2418
        %v2420 = vrot.slane %v2419, 1
        %v2421 = vmax.f32 %v2419, %v2420
        %v2422 = vmax.f32 %v2341, %v2347
        %v2423 = vrot.slane %v2422, 4
        %v2424 = vmax.f32 %v2422, %v2423
        %v2425 = vrot.slane %v2424, 2
        %v2426 = vmax.f32 %v2424, %v2425
        %v2427 = vrot.slane %v2426, 1
        %v2428 = vmax.f32 %v2426, %v2427
        %v2429 = vsel %vm2384, %v2342, -inf
        %v2430 = vsel %vm2384, %v2348, -inf
        %v2431 = vmax.f32 %v2429, %v2430
        %v2432 = vrot.slane %v2431, 4
        %v2433 = vmax.f32 %v2431, %v2432
        %v2434 = vrot.slane %v2433, 2
        %v2435 = vmax.f32 %v2433, %v2434
        %v2436 = vrot.slane %v2435, 1
        %v2437 = vmax.f32 %v2435, %v2436
        %v2438 = vld [vmem:[%s247] sm:$0xff]
        %v2439 = vld [vmem:[%s247 + $0x8] sm:$0xf]
        %vm2452 = vcmask 1041409
        %v2453 = vsel %vm2452, %v2400, %v2355
        %v2454 = vsel %vm2452, %v2407, %v2362
        %v2455 = vsel %vm2452, %v2414, %v2369
        %v2456 = vsel %vm2452, %v2421, %v2376
        %v2457 = vsel %vm2452, %v2428, %v2383
        %v2458 = vsel %vm2452, %v2437, %v2393
        %v2466 = vcombine.high %v2438, %v2438
        %v2468 = vunpack.c.l.s4 1983009808
        %v2469 = vunpack.c.0.s8 %v2468
        %v2470 = vlaneseq
        %v2471 = vshrl.u32 %v2470, 7
        %v2472 = vsub.s32 %v2469, %v2471
        %v2473 = vrot.slane %v2438, %v2472
        %v2475 = vunpack.c.l.s4 1983009808
        %v2476 = vunpack.c.0.s8 %v2475
        %v2477 = vlaneseq
        %v2478 = vshrl.u32 %v2477, 7
        %v2479 = vsub.s32 %v2476, %v2478
        %v2480 = vrot.slane %v2466, %v2479
        %v2481 = vcombine.high %v2473, %v2473
        %v2482 = vcombine.high %v2480, %v2480
        %v2484 = vunpack.c.l.s4 1983009808
        %v2485 = vunpack.c.0.s8 %v2484
        %v2486 = vlaneseq
        %v2487 = vshrl.u32 %v2486, 7
        %v2488 = vsub.s32 %v2485, %v2487
        %v2489 = vrot.slane %v2439, %v2488
        %v2490 = vcombine.high %v2489, %v2489
        %v2496 = vsel %vm2384, %v2458, 0
        %v2498 = vsel %vm2384, %v2490, 0
        %2500 = vmatprep.subr.mxu0 0.0
        %2501 = vmatpush1.xpose.msra.mxu0 0.0
        %2502 = vmatprep.subr.mxu0 0.0
        %2503 = vmatpush1.xpose.msra.mxu0 0.0
        %2504 = vmatprep.subr.mxu0 0.0
        %2505 = vmatpush1.xpose.msra.mxu0 0.0
        %2506 = vmatprep.subr.mxu0 0.0
        %2507 = vmatpush1.xpose.msra.mxu0 0.0
        %2508 = vmatprep.subr.mxu0 0.0
        %2509 = vmatpush1.xpose.msra.mxu0 0.0
        %2510 = vmatprep.subr.mxu0 0.0
        %2511 = vmatpush1.xpose.msra.mxu0 0.0
        %2512 = vmatprep.subr.mxu0 0.0
        %2513 = vmatpush1.xpose.msra.mxu0 0.0
        %2514 = vmatprep.subr.mxu0 0.0
        %2515 = vmatpush1.xpose.msra.mxu0 0.0
        %2516 = vmatprep.subr.mxu0 0.0
        %2517 = vmatpush1.xpose.msra.mxu0 0.0
        %2518 = vmatprep.subr.mxu0 0.0
        %2519 = vmatpush1.xpose.msra.mxu0 0.0
        %2520 = vmatprep.subr.mxu0 0.0
        %2521 = vmatpush1.xpose.msra.mxu0 0.0
        %2522 = vmatprep.subr.mxu0 0.0
        %2523 = vmatpush1.xpose.msra.mxu0 0.0
        %2524 = vmatprep.subr.mxu0 0.0
        %2525 = vmatpush1.xpose.msra.mxu0 0.0
        %2526 = vmatprep.subr.mxu0 0.0
        %2527 = vmatpush1.xpose.msra.mxu0 0.0
        %2528 = vmatprep.subr.mxu0 0.0
        %2529 = vmatpush1.xpose.msra.mxu0 0.0
        %2530 = vmatprep.subr.mxu0 %v2481
        %2531 = vmatpush1.xpose.msra.mxu0 %v2473
        %2532 = vmatprep.subr.mxu0 0.0
        %2533 = vmatpush2.xpose.msra.mxu0 0.0
        %2534 = vmatprep.subr.mxu0 0.0
        %2535 = vmatpush2.xpose.msra.mxu0 0.0
        %2536 = vmatprep.subr.mxu0 0.0
        %2537 = vmatpush2.xpose.msra.mxu0 0.0
        %2538 = vmatprep.subr.mxu0 0.0
        %2539 = vmatpush2.xpose.msra.mxu0 0.0
        %2540 = vmatprep.subr.mxu0 0.0
        %2541 = vmatpush2.xpose.msra.mxu0 0.0
        %2542 = vmatprep.subr.mxu0 0.0
        %2543 = vmatpush2.xpose.msra.mxu0 0.0
        %2544 = vmatprep.subr.mxu0 0.0
        %2545 = vmatpush2.xpose.msra.mxu0 0.0
        %2546 = vmatprep.subr.mxu0 0.0
        %2547 = vmatpush2.xpose.msra.mxu0 0.0
        %2548 = vmatprep.subr.mxu0 0.0
        %2549 = vmatpush2.xpose.msra.mxu0 0.0
        %2550 = vmatprep.subr.mxu0 0.0
        %2551 = vmatpush2.xpose.msra.mxu0 0.0
        %2552 = vmatprep.subr.mxu0 0.0
        %2553 = vmatpush2.xpose.msra.mxu0 0.0
        %2554 = vmatprep.subr.mxu0 0.0
        %2555 = vmatpush2.xpose.msra.mxu0 0.0
        %2556 = vmatprep.subr.mxu0 0.0
        %2557 = vmatpush2.xpose.msra.mxu0 0.0
        %2558 = vmatprep.subr.mxu0 0.0
        %2559 = vmatpush2.xpose.msra.mxu0 0.0
        %2560 = vmatprep.subr.mxu0 0.0
        %2561 = vmatpush2.xpose.msra.mxu0 0.0
        %2562 = vmatprep.subr.mxu0 0.0
        %2563 = vmatpush2.xpose.msra.mxu0 0.0
        %2564 = vmatprep.mubr.f32.mxu0 %v2454
        %2565 = vmatmul.mubr.f32.gmra.mxu0 %v2453
        %v2566 = vpop.f32.mrf.mxu0
        %v2567 = vadd.f32 0.0, %v2566
        %v2568 = vpop.f32.mrf.mxu0
        %2569 = vdwg.mxu0
        %2570 = vmatprep.subr.mxu0 0.0
        %2571 = vmatpush1.xpose.msra.mxu0 0.0
        %2572 = vmatprep.subr.mxu0 0.0
        %2573 = vmatpush1.xpose.msra.mxu0 0.0
        %2574 = vmatprep.subr.mxu0 0.0
        %2575 = vmatpush1.xpose.msra.mxu0 0.0
        %2576 = vmatprep.subr.mxu0 0.0
        %2577 = vmatpush1.xpose.msra.mxu0 0.0
        %2578 = vmatprep.subr.mxu0 0.0
        %2579 = vmatpush1.xpose.msra.mxu0 0.0
        %2580 = vmatprep.subr.mxu0 0.0
        %2581 = vmatpush1.xpose.msra.mxu0 0.0
        %2582 = vmatprep.subr.mxu0 0.0
        %2583 = vmatpush1.xpose.msra.mxu0 0.0
        %2584 = vmatprep.subr.mxu0 0.0
        %2585 = vmatpush1.xpose.msra.mxu0 0.0
        %2586 = vmatprep.subr.mxu0 0.0
        %2587 = vmatpush1.xpose.msra.mxu0 0.0
        %2588 = vmatprep.subr.mxu0 0.0
        %2589 = vmatpush1.xpose.msra.mxu0 0.0
        %2590 = vmatprep.subr.mxu0 0.0
        %2591 = vmatpush1.xpose.msra.mxu0 0.0
        %2592 = vmatprep.subr.mxu0 0.0
        %2593 = vmatpush1.xpose.msra.mxu0 0.0
        %2594 = vmatprep.subr.mxu0 0.0
        %2595 = vmatpush1.xpose.msra.mxu0 0.0
        %2596 = vmatprep.subr.mxu0 0.0
        %2597 = vmatpush1.xpose.msra.mxu0 0.0
        %2598 = vmatprep.subr.mxu0 0.0
        %2599 = vmatpush1.xpose.msra.mxu0 0.0
        %2600 = vmatprep.subr.mxu0 %v2482
        %2601 = vmatpush1.xpose.msra.mxu0 %v2480
        %2602 = vmatprep.subr.mxu0 0.0
        %2603 = vmatpush2.xpose.msra.mxu0 0.0
        %2604 = vmatprep.subr.mxu0 0.0
        %2605 = vmatpush2.xpose.msra.mxu0 0.0
        %2606 = vmatprep.subr.mxu0 0.0
        %2607 = vmatpush2.xpose.msra.mxu0 0.0
        %2608 = vmatprep.subr.mxu0 0.0
        %2609 = vmatpush2.xpose.msra.mxu0 0.0
        %2610 = vmatprep.subr.mxu0 0.0
        %2611 = vmatpush2.xpose.msra.mxu0 0.0
        %2612 = vmatprep.subr.mxu0 0.0
        %2613 = vmatpush2.xpose.msra.mxu0 0.0
        %2614 = vmatprep.subr.mxu0 0.0
        %2615 = vmatpush2.xpose.msra.mxu0 0.0
        %2616 = vmatprep.subr.mxu0 0.0
        %2617 = vmatpush2.xpose.msra.mxu0 0.0
        %2618 = vmatprep.subr.mxu0 0.0
        %2619 = vmatpush2.xpose.msra.mxu0 0.0
        %2620 = vmatprep.subr.mxu0 0.0
        %2621 = vmatpush2.xpose.msra.mxu0 0.0
        %2622 = vmatprep.subr.mxu0 0.0
        %2623 = vmatpush2.xpose.msra.mxu0 0.0
        %2624 = vmatprep.subr.mxu0 0.0
        %2625 = vmatpush2.xpose.msra.mxu0 0.0
        %2626 = vmatprep.subr.mxu0 0.0
        %2627 = vmatpush2.xpose.msra.mxu0 0.0
        %2628 = vmatprep.subr.mxu0 0.0
        %2629 = vmatpush2.xpose.msra.mxu0 0.0
        %2630 = vmatprep.subr.mxu0 0.0
        %2631 = vmatpush2.xpose.msra.mxu0 0.0
        %2632 = vmatprep.subr.mxu0 0.0
        %2633 = vmatpush2.xpose.msra.mxu0 0.0
        %2634 = vmatprep.mubr.f32.mxu0 %v2456
        %2635 = vmatmul.mubr.f32.gmra.mxu0 %v2455
        %v2636 = vpop.f32.mrf.mxu0
        %v2637 = vadd.f32 %v2567, %v2636
        %v2638 = vpop.f32.mrf.mxu0
        %2639 = vdwg.mxu0
        %2640 = vmatprep.subr.mxu0 0.0
        %2641 = vmatpush1.xpose.msra.mxu0 0.0
        %2642 = vmatprep.subr.mxu0 0.0
        %2643 = vmatpush1.xpose.msra.mxu0 0.0
        %2644 = vmatprep.subr.mxu0 0.0
        %2645 = vmatpush1.xpose.msra.mxu0 0.0
        %2646 = vmatprep.subr.mxu0 0.0
        %2647 = vmatpush1.xpose.msra.mxu0 0.0
        %2648 = vmatprep.subr.mxu0 0.0
        %2649 = vmatpush1.xpose.msra.mxu0 0.0
        %2650 = vmatprep.subr.mxu0 0.0
        %2651 = vmatpush1.xpose.msra.mxu0 0.0
        %2652 = vmatprep.subr.mxu0 0.0
        %2653 = vmatpush1.xpose.msra.mxu0 0.0
        %2654 = vmatprep.subr.mxu0 0.0
        %2655 = vmatpush1.xpose.msra.mxu0 0.0
        %2656 = vmatprep.subr.mxu0 0.0
        %2657 = vmatpush1.xpose.msra.mxu0 0.0
        %2658 = vmatprep.subr.mxu0 0.0
        %2659 = vmatpush1.xpose.msra.mxu0 0.0
        %2660 = vmatprep.subr.mxu0 0.0
        %2661 = vmatpush1.xpose.msra.mxu0 0.0
        %2662 = vmatprep.subr.mxu0 0.0
        %2663 = vmatpush1.xpose.msra.mxu0 0.0
        %2664 = vmatprep.subr.mxu0 0.0
        %2665 = vmatpush1.xpose.msra.mxu0 0.0
        %2666 = vmatprep.subr.mxu0 0.0
        %2667 = vmatpush1.xpose.msra.mxu0 0.0
        %2668 = vmatprep.subr.mxu0 0.0
        %2669 = vmatpush1.xpose.msra.mxu0 0.0
        %2670 = vmatprep.subr.mxu0 %v2498
        %2671 = vmatpush1.xpose.msra.mxu0 %v2489
        %2672 = vmatprep.subr.mxu0 0.0
        %2673 = vmatpush2.xpose.msra.mxu0 0.0
        %2674 = vmatprep.subr.mxu0 0.0
        %2675 = vmatpush2.xpose.msra.mxu0 0.0
        %2676 = vmatprep.subr.mxu0 0.0
        %2677 = vmatpush2.xpose.msra.mxu0 0.0
        %2678 = vmatprep.subr.mxu0 0.0
        %2679 = vmatpush2.xpose.msra.mxu0 0.0
        %2680 = vmatprep.subr.mxu0 0.0
        %2681 = vmatpush2.xpose.msra.mxu0 0.0
        %2682 = vmatprep.subr.mxu0 0.0
        %2683 = vmatpush2.xpose.msra.mxu0 0.0
        %2684 = vmatprep.subr.mxu0 0.0
        %2685 = vmatpush2.xpose.msra.mxu0 0.0
        %2686 = vmatprep.subr.mxu0 0.0
        %2687 = vmatpush2.xpose.msra.mxu0 0.0
        %2688 = vmatprep.subr.mxu0 0.0
        %2689 = vmatpush2.xpose.msra.mxu0 0.0
        %2690 = vmatprep.subr.mxu0 0.0
        %2691 = vmatpush2.xpose.msra.mxu0 0.0
        %2692 = vmatprep.subr.mxu0 0.0
        %2693 = vmatpush2.xpose.msra.mxu0 0.0
        %2694 = vmatprep.subr.mxu0 0.0
        %2695 = vmatpush2.xpose.msra.mxu0 0.0
        %2696 = vmatprep.subr.mxu0 0.0
        %2697 = vmatpush2.xpose.msra.mxu0 0.0
        %2698 = vmatprep.subr.mxu0 0.0
        %2699 = vmatpush2.xpose.msra.mxu0 0.0
        %2700 = vmatprep.subr.mxu0 0.0
        %2701 = vmatpush2.xpose.msra.mxu0 0.0
        %2702 = vmatprep.subr.mxu0 0.0
        %2703 = vmatpush2.xpose.msra.mxu0 0.0
        %2704 = vmatprep.mubr.f32.mxu0 %v2496
        %2705 = vmatmul.mubr.f32.gmra.mxu0 %v2457
        %v2706 = vpop.f32.mrf.mxu0
        %v2707 = vadd.f32 %v2637, %v2706
        %v2708 = vpop.f32.mrf.mxu0
        %2709 = vdwg.mxu0
        %v2710 = vld [vmem:[#allocation2] sm:$0x3]
        %v2711 = vadd.f32 %v2710, %v2707
        %vm2712 = vcmask 9216
        %2713 = vst.msk [vmem:[#allocation2] sm:$0x3] %vm2712, %v2711
        %p2714 = scmp.eq.s32.totalorder %s17, 2
        // Predicated region
        $region45: #{cnn_forward.1} parent=39 // pred_check
          %p2715 = pneg %p2714
        $region46: #{cnn_forward.1} parent=39 // pred_check_branch
          %2717 = sbr.rel (%p2715) target = $region48
        $region47: #{cnn_forward.1} parent=39 // pred_region
          %v2718 = vld [vmem:[#allocation2] sm:$0x3]
          %v2719 = vld [vmem:[%s4] sm:$0x1]
          %v2721 = vlaneseq
          %v2722 = vshrl.u32 %v2721, 7
          %v2723 = vsub.s32 0, %v2722
          %v2724 = vrot.slane %v2719, %v2723
          %v2726 = vadd.f32 %v2718, %v2724
          %v2727 = vsel %vm2712, %v2726, -inf
          %2728 = vmax.xlane.f32.xlu0 %v2727
          %v2729 = vpop.xlane.xlu0 %2728
          %v2730 = vsub.f32 %v2726, %v2729
          %v2731 = vmul.f32 %v2730, 1.442695
          %v2732 = vpow.pop %v2731
          %v2733 = vsel %vm2712, %v2732, 0.0
          %2734 = vadd.xlane.f32.xlu0 %v2733
          %v2735 = vpop.xlane.xlu0 %2734
          %v2736 = vlog2.pop %v2735
          %v2737 = vmul.f32 %v2736, 0.6931472
          %v2738 = vsub.f32 %v2730, %v2737
          %2739 = vst.msk [vmem:[#allocation3] sm:$0x3] %vm2712, %v2738
        $region48: #{cnn_forward.1} parent=39 // pred_fallthru
          _
        // Predicated region
        $region49: #{cnn_forward.1} parent=39 // pred_check
          %p2740 = pneg %p150
        $region50: #{cnn_forward.1} parent=39 // pred_check_branch
          %2742 = sbr.rel (%p2740) target = $region52
        $region51: #{cnn_forward.1} parent=39 // pred_region
          %s2744 = ssub.s32 32, 32
          %2745 = vsyncadd [#allocation4], %s2744
          %s2747 = sshll.u32 [#allocation3], 4
          %s2748 = int_to_ptr.vmem [resolvable:$true] %s2747
          %2750 = dma.vmem_to_hbm [thread:$0]  %s2748, 32, %s5, [#allocation4]
        $region52: #{cnn_forward.1} parent=39 // pred_fallthru
          _
        // Predicated region
        $region53: #{cnn_forward.1} parent=39 // pred_check
          %p2751 = pneg %p150
        $region54: #{cnn_forward.1} parent=39 // pred_check_branch
          %2753 = sbr.rel (%p2751) target = $region56
        $region55: #{cnn_forward.1} parent=39 // pred_region
          %2754 = dma.done [#allocation4], 32
        $region56: #{cnn_forward.1} parent=39 // pred_fallthru
          _
      $region40: #{cnn_forward.1} parent=5 // pred_fallthru
        _
      %p2755 = scmp.le.s32.totalorder 2, %s12
      // Predicated region
      $region57: #{cnn_forward.1} parent=5 // pred_check
        %p2756 = pneg %p2755
      $region58: #{cnn_forward.1} parent=5 // pred_check_branch
        %2758 = sbr.rel (%p2756) target = $region60
      $region59: #{cnn_forward.1} parent=5 // pred_region
        %s2759 = ssub.s32 %s12, 2
      $region60: #{cnn_forward.1} parent=5 // pred_fallthru
        _
    $region6: #{cnn_forward.1} parent=1 // loop_footer
      %s16 = sadd.s32 1, %s12
    $region7: #{cnn_forward.1} parent=1 // loop_footer_branch
      %11 = sbr.rel target = $region3
    $region8: #{cnn_forward.1} parent=1 // loop_exit
      _
    %2760 = vsyncpa [#allocation4], 1
    %s2761 = scalar_lea.sflag [#allocation4], 1
    %2762 = vsyncpa %s2761, 1

</llo_original>
